<compile_context>
chip_gen: v6e
topology: v6e:2x2x1
jax: 0.10.0
libtpu: 0.0.40
codegen_flags: <defaults>
</compile_context>

<pallas_src>
import jax
import jax.numpy as jnp
from jax import lax
from jax.experimental import pallas as pl
from jax.experimental.pallas import tpu as pltpu


def _round_up(x, m):
    return (x + m - 1) // m * m


def _patch_merging_kernel(wc_ref, y_ref, o_ref, ypad_ref):
    """One batch-block (TB images) per grid step.

    wc_ref   : (9, out_dim, C4)  combined depthwise*pointwise weights (compute dtype)
    y_ref    : (TB, H2, W2, C4)  merged + BatchNorm'ed activations (compute dtype)
    o_ref    : (out_dim, TB*H2*W2) channel-major, lane-dense output block
    ypad_ref : (TB, H2+2, Wpad, C4) f32 VMEM scratch holding the zero-halo'ed tile
    """
    TB, H2, W2, C4 = y_ref.shape
    Hp = H2 + 2
    Wpad = ypad_ref.shape[2]           # W2+2 rounded up to a multiple of 8
    N = TB * H2 * W2
    sdt = ypad_ref.dtype
    wdt = wc_ref.dtype

    # Zero only the 1-pixel halo (4 tiny edge stores), every step -- deliberately
    # NOT gated on program_id so it stays correct when the "parallel" batch axis
    # is partitioned across TensorCores (each core has its own scratch).
    ypad_ref[:, 0:1, :, :] = jnp.zeros((TB, 1, Wpad, C4), sdt)
    ypad_ref[:, Hp - 1:Hp, :, :] = jnp.zeros((TB, 1, Wpad, C4), sdt)
    ypad_ref[:, :, 0:1, :] = jnp.zeros((TB, Hp, 1, C4), sdt)
    ypad_ref[:, :, W2 + 1:W2 + 2, :] = jnp.zeros((TB, Hp, 1, C4), sdt)

    # Interior: BN was folded into the activations by the wrapper (fused there
    # with the required patch-merge transpose), so this is a plain copy and the
    # post-BN halo is exactly zero -- no per-pixel BN math, no iota/where mask.
    ypad_ref[:, 1:H2 + 1, 1:W2 + 1, :] = y_ref[...].astype(sdt)

    # Fused depthwise-3x3 + pointwise-1x1: 9 accumulated MXU contractions with
    # the pre-combined weights.  The padded tile is sliced per tap (bounded vreg
    # live range); the result comes out channel-major (out_dim, N) directly, so
    # the store is lane-dense and there is no trailing in-kernel transpose.
    def tap(kh, kw):
        xt = ypad_ref[:, kh:kh + H2, kw:kw + W2, :].reshape(N, C4).astype(wdt)
        return lax.dot_general(
            wc_ref[kh * 3 + kw], xt,
            dimension_numbers=(((1,), (1,)), ((), ())),
            preferred_element_type=jnp.float32)          # (out_dim, N), f32 acc

    acc = tap(0, 0)                    # init with first tap: no zeros pass
    for kh in range(3):
        for kw in range(3):
            if kh == 0 and kw == 0:
                continue
            acc = acc + tap(kh, kw)

    o_ref[...] = acc.astype(o_ref.dtype)


def _choose_tb(B, H2, W2, C4, out_dim, itemsize):
    """Pick how many batch images to block per grid step."""
    hw = H2 * W2
    wpad = _round_up(W2 + 2, 8)
    per_img = ((H2 + 2) * wpad * C4 * 4          # f32 halo scratch
               + 2 * hw * C4 * itemsize          # double-buffered input block
               + 2 * out_dim * hw * 4)           # double-buffered output block
    budget = 24 * 1024 * 1024                    # conservative across v5e/v6e/v7x

    def ok(t):
        return t <= B and B % t == 0 and t * per_img <= budget

    tb = 1
    # Grow for lane density / matmul N, but keep >=2 grid steps when B allows so
    # both v7x TensorCores get work.
    while ok(tb * 2) and tb * hw < 512 and B // (tb * 2) >= 2:
        tb *= 2
    # Below 128 output lanes the masked-store penalty outweighs extra grid steps.
    while ok(tb * 2) and tb * hw < 128:
        tb *= 2
    return tb


def patch_merging1(x_nchw, gamma, beta, run_mean, run_var, w_dw9, w_pw,
                   eps=1e-5, compute_dtype=jnp.bfloat16):
    """PatchMerging1.forward (inference-mode BN).

    x_nchw: (B, C, H, W) with H, W even.  Returns (B, out_dim, H//2, W//2).
    """
    B, C, H, W = x_nchw.shape
    H2, W2 = H // 2, W // 2
    C4 = 4 * C
    out_dim = w_pw.shape[1]

    # --- 2x2 patch merge as ONE reshape/transpose pass.  Channel order matches
    #     torch.cat([x0, x1, x2, x3], dim=1):  g = 2*dw + dh.
    xm = x_nchw.reshape(B, C, H2, 2, W2, 2)
    xm = jnp.transpose(xm, (0, 2, 4, 5, 3, 1)).reshape(B, H2, W2, C4)

    # --- inference-mode BatchNorm folded to scale/shift; XLA fuses the FMA into
    #     the transpose copy above, and the kernel then only needs a zero halo.
    scale = gamma / jnp.sqrt(run_var + eps)
    shift = beta - run_mean * scale
    y = (xm.astype(jnp.float32) * scale + shift).astype(compute_dtype)

    # --- fold depthwise(3x3) o pointwise(1x1) into per-tap combined weights:
    #     w_comb[tap, o, c] = w_dw[tap, c] * w_pw[c, o]  (product taken in f32).
    w_comb = (w_dw9[:, None, :].astype(jnp.float32)
              * jnp.transpose(w_pw)[None, :, :].astype(jnp.float32)
              ).astype(compute_dtype)                       # (9, out_dim, C4)

    TB = _choose_tb(B, H2, W2, C4, out_dim, jnp.dtype(compute_dtype).itemsize)
    G = B // TB
    n_blk = TB * H2 * W2
    if G > 1 and n_blk % 128 != 0:
        # Keep the output block's lane dim equal to the full dim so the
        # BlockSpec stays legal on all generations.
        # TODO(synk): row-tile H2 instead when a whole batch no longer fits VMEM.
        TB, G, n_blk = B, 1, B * H2 * W2

    wpad = _round_up(W2 + 2, 8)

    out_flat = pl.pallas_call(
        _patch_merging_kernel,
        out_shape=jax.ShapeDtypeStruct((out_dim, B * H2 * W2), x_nchw.dtype),
        grid_spec=pltpu.PrefetchScalarGridSpec(
            num_scalar_prefetch=0,
            grid=(G,),
            in_specs=[
                pl.BlockSpec((9, out_dim, C4), lambda g: (0, 0, 0)),
                pl.BlockSpec((TB, H2, W2, C4), lambda g: (g, 0, 0, 0)),
            ],
            out_specs=pl.BlockSpec((out_dim, n_blk), lambda g: (0, g)),
            scratch_shapes=[pltpu.VMEM((TB, H2 + 2, wpad, C4), jnp.float32)],
        ),
        compiler_params=pltpu.CompilerParams(
            dimension_semantics=("parallel",),
            vmem_limit_bytes=64 * 1024 * 1024),
    )(w_comb, y)

    # Channel-major lane-dense kernel output -> NCHW (cheap layout plumbing on
    # the small output tensor; keeps the in-kernel store unmasked).
    return jnp.transpose(out_flat.reshape(out_dim, B, H2, W2), (1, 0, 2, 3))


def _reference(x_nchw, gamma, beta, run_mean, run_var, w_dw9, w_pw, eps=1e-5):
    """Pure-JAX reference (independent construction) for a sanity check."""
    B, C, H, W = x_nchw.shape
    C4 = 4 * C
    x = jnp.transpose(x_nchw, (0, 2, 3, 1))
    xm = jnp.concatenate(
        [x[:, 0::2, 0::2, :], x[:, 1::2, 0::2, :],
         x[:, 0::2, 1::2, :], x[:, 1::2, 1::2, :]], axis=-1)
    y = (xm - run_mean) / jnp.sqrt(run_var + eps) * gamma + beta
    k = w_dw9.reshape(3, 3, 1, C4)                        # HWIO, grouped
    dw = lax.conv_general_dilated(
        y, k, window_strides=(1, 1), padding="SAME",
        dimension_numbers=("NHWC", "HWIO", "NHWC"), feature_group_count=C4)
    pw = jnp.einsum("bhwc,co->bhwo", dw, w_pw)
    return jnp.transpose(pw, (0, 3, 1, 2))


if __name__ == "__main__":
    # PatchMerging1(dim=4, out_dim=8), input x: (B=2, C=4, H=16, W=16)
    dim, out_dim = 4, 8
    B, H, W = 2, 16, 16
    C4 = 4 * dim

    key = jax.random.PRNGKey(0)
    kx, kg, kb, km, kv, kd, kp = jax.random.split(key, 7)

    x = jax.random.normal(kx, (B, dim, H, W), jnp.float32)

    # BatchNorm2d(4*dim) parameters / running stats (deterministic synthetic init)
    gamma = 1.0 + 0.1 * jax.random.normal(kg, (C4,), jnp.float32)
    beta = 0.1 * jax.random.normal(kb, (C4,), jnp.float32)
    run_mean = 0.1 * jax.random.normal(km, (C4,), jnp.float32)
    run_var = 1.0 + 0.1 * jax.random.uniform(kv, (C4,), jnp.float32)

    # DepthwiseSeparableConv(4*dim, out_dim), both convs bias-free:
    #   depthwise (4C,1,3,3) -> stored as (9, 4C) with row = kh*3 + kw
    #   pointwise (out_dim,4C,1,1) -> stored as (4C, out_dim)
    w_dw9 = 0.1 * jax.random.normal(kd, (9, C4), jnp.float32)
    w_pw = 0.1 * jax.random.normal(kp, (C4, out_dim), jnp.float32)

    ref = _reference(x, gamma, beta, run_mean, run_var, w_dw9, w_pw)

    # f32 compute path: tight check against the reference.
    out_f32 = patch_merging1(x, gamma, beta, run_mean, run_var, w_dw9, w_pw,
                             compute_dtype=jnp.float32)
    out_f32 = jax.block_until_ready(out_f32)
    assert out_f32.shape == (B, out_dim, H // 2, W // 2), out_f32.shape
    assert jnp.allclose(out_f32, ref, atol=1e-3, rtol=1e-3), \
        float(jnp.max(jnp.abs(out_f32 - ref)))

    # Default bf16 compute path (halved HBM traffic, f32 accumulation): loose check.
    out_bf16 = patch_merging1(x, gamma, beta, run_mean, run_var, w_dw9, w_pw)
    out_bf16 = jax.block_until_ready(out_bf16)
    assert out_bf16.shape == (B, out_dim, H // 2, W // 2), out_bf16.shape
    assert jnp.allclose(out_bf16, ref, atol=5e-2, rtol=5e-2), \
        float(jnp.max(jnp.abs(out_bf16 - ref)))

    print("KERNEL_OK")
</pallas_src>

<mosaic_0001>
module attributes {stable_mosaic.version = 11 : i64} {
  func.func @_patch_merging_kernel(%arg0: i32, %arg1: memref<9x8x16xf32, #tpu.memory_space<vmem>>, %arg2: memref<2x8x8x16xf32, #tpu.memory_space<vmem>>, %arg3: memref<8x128xf32, #tpu.memory_space<vmem>>, %arg4: memref<2x10x16x16xf32, #tpu.memory_space<vmem>>) attributes {dimension_semantics = [#tpu.dimension_semantics<parallel>], iteration_bounds = array<i64: 1>, scalar_prefetch = 0 : i64, scratch_operands = 1 : i64, tpu.core_type = #tpu.core_type<tc>, window_params = [{pipeline_mode = #tpu.pipeline_mode<synchronous>, transform_indices = @transform_0, window_bounds = array<i64: 9, 8, 16>}, {transform_indices = @transform_1, window_bounds = array<i64: 2, 8, 8, 16>}, {transform_indices = @transform_2, window_bounds = array<i64: 8, 128>}]} {
    %cst = arith.constant 0.000000e+00 : f32
    %0 = vector.broadcast %cst : f32 to vector<2x1x16x16xf32>
    %c0 = arith.constant 0 : index
    %c0_0 = arith.constant 0 : index
    %c0_1 = arith.constant 0 : index
    %c0_2 = arith.constant 0 : index
    %1 = vector.load %arg4[%c0, %c0_0, %c0_1, %c0_2] : memref<2x10x16x16xf32, #tpu.memory_space<vmem>>, vector<2x1x16x16xf32>
    tpu.vector_store %arg4[%c0, %c0_0, %c0_1, %c0_2], %0 {strides = array<i32>} : memref<2x10x16x16xf32, #tpu.memory_space<vmem>>, vector<2x1x16x16xf32>,
    %cst_3 = arith.constant 0.000000e+00 : f32
    %2 = vector.broadcast %cst_3 : f32 to vector<2x1x16x16xf32>
    %c0_4 = arith.constant 0 : index
    %c9 = arith.constant 9 : index
    %c0_5 = arith.constant 0 : index
    %c0_6 = arith.constant 0 : index
    %3 = vector.load %arg4[%c0_4, %c9, %c0_5, %c0_6] : memref<2x10x16x16xf32, #tpu.memory_space<vmem>>, vector<2x1x16x16xf32>
    tpu.vector_store %arg4[%c0_4, %c9, %c0_5, %c0_6], %2 {strides = array<i32>} : memref<2x10x16x16xf32, #tpu.memory_space<vmem>>, vector<2x1x16x16xf32>,
    %cst_7 = arith.constant 0.000000e+00 : f32
    %4 = vector.broadcast %cst_7 : f32 to vector<2x10x1x16xf32>
    %c0_8 = arith.constant 0 : index
    %c0_9 = arith.constant 0 : index
    %c0_10 = arith.constant 0 : index
    %c0_11 = arith.constant 0 : index
    %5 = vector.load %arg4[%c0_8, %c0_9, %c0_10, %c0_11] : memref<2x10x16x16xf32, #tpu.memory_space<vmem>>, vector<2x10x1x16xf32>
    tpu.vector_store %arg4[%c0_8, %c0_9, %c0_10, %c0_11], %4 {strides = array<i32>} : memref<2x10x16x16xf32, #tpu.memory_space<vmem>>, vector<2x10x1x16xf32>,
    %cst_12 = arith.constant 0.000000e+00 : f32
    %6 = vector.broadcast %cst_12 : f32 to vector<2x10x1x16xf32>
    %c0_13 = arith.constant 0 : index
    %c0_14 = arith.constant 0 : index
    %c9_15 = arith.constant 9 : index
    %c0_16 = arith.constant 0 : index
    %7 = vector.load %arg4[%c0_13, %c0_14, %c9_15, %c0_16] : memref<2x10x16x16xf32, #tpu.memory_space<vmem>>, vector<2x10x1x16xf32>
    tpu.vector_store %arg4[%c0_13, %c0_14, %c9_15, %c0_16], %6 {strides = array<i32>} : memref<2x10x16x16xf32, #tpu.memory_space<vmem>>, vector<2x10x1x16xf32>,
    %c0_17 = arith.constant 0 : index
    %c0_18 = arith.constant 0 : index
    %c0_19 = arith.constant 0 : index
    %c0_20 = arith.constant 0 : index
    %8 = vector.load %arg2[%c0_17, %c0_18, %c0_19, %c0_20] : memref<2x8x8x16xf32, #tpu.memory_space<vmem>>, vector<2x8x8x16xf32>
    %c0_21 = arith.constant 0 : index
    %c1 = arith.constant 1 : index
    %c1_22 = arith.constant 1 : index
    %c0_23 = arith.constant 0 : index
    %9 = vector.load %arg4[%c0_21, %c1, %c1_22, %c0_23] : memref<2x10x16x16xf32, #tpu.memory_space<vmem>>, vector<2x8x8x16xf32>
    tpu.vector_store %arg4[%c0_21, %c1, %c1_22, %c0_23], %8 {strides = array<i32>} : memref<2x10x16x16xf32, #tpu.memory_space<vmem>>, vector<2x8x8x16xf32>,
    %c0_24 = arith.constant 0 : index
    %c0_25 = arith.constant 0 : index
    %c0_26 = arith.constant 0 : index
    %c0_27 = arith.constant 0 : index
    %10 = vector.load %arg4[%c0_24, %c0_25, %c0_26, %c0_27] : memref<2x10x16x16xf32, #tpu.memory_space<vmem>>, vector<2x8x8x16xf32>
    %11 = vector.shape_cast %10 : vector<2x8x8x16xf32> to vector<128x16xf32>
    %c0_28 = arith.constant 0 : index
    %c0_29 = arith.constant 0 : index
    %c0_30 = arith.constant 0 : index
    %12 = vector.load %arg1[%c0_28, %c0_29, %c0_30] : memref<9x8x16xf32, #tpu.memory_space<vmem>>, vector<1x8x16xf32>
    %13 = vector.shape_cast %12 : vector<1x8x16xf32> to vector<8x16xf32>
    %cst_31 = arith.constant dense<0.000000e+00> : vector<8x128xf32>
    %14 = tpu.matmul %13, %11, %cst_31 {dimension_numbers = #tpu.dot_dimension_numbers<[1], [1], [0], [0], [0, 0, 1, 0], [], []>} : vector<8x16xf32>, vector<128x16xf32>, vector<8x128xf32> -> vector<8x128xf32>
    %c0_32 = arith.constant 0 : index
    %c0_33 = arith.constant 0 : index
    %c1_34 = arith.constant 1 : index
    %c0_35 = arith.constant 0 : index
    %15 = vector.load %arg4[%c0_32, %c0_33, %c1_34, %c0_35] : memref<2x10x16x16xf32, #tpu.memory_space<vmem>>, vector<2x8x8x16xf32>
    %16 = vector.shape_cast %15 : vector<2x8x8x16xf32> to vector<128x16xf32>
    %c1_36 = arith.constant 1 : index
    %c0_37 = arith.constant 0 : index
    %c0_38 = arith.constant 0 : index
    %17 = vector.load %arg1[%c1_36, %c0_37, %c0_38] : memref<9x8x16xf32, #tpu.memory_space<vmem>>, vector<1x8x16xf32>
    %18 = vector.shape_cast %17 : vector<1x8x16xf32> to vector<8x16xf32>
    %cst_39 = arith.constant dense<0.000000e+00> : vector<8x128xf32>
    %19 = tpu.matmul %18, %16, %cst_39 {dimension_numbers = #tpu.dot_dimension_numbers<[1], [1], [0], [0], [0, 0, 1, 0], [], []>} : vector<8x16xf32>, vector<128x16xf32>, vector<8x128xf32> -> vector<8x128xf32>
    %20 = arith.addf %14, %19 : vector<8x128xf32>
    %c0_40 = arith.constant 0 : index
    %c0_41 = arith.constant 0 : index
    %c2 = arith.constant 2 : index
    %c0_42 = arith.constant 0 : index
    %21 = vector.load %arg4[%c0_40, %c0_41, %c2, %c0_42] : memref<2x10x16x16xf32, #tpu.memory_space<vmem>>, vector<2x8x8x16xf32>
    %22 = vector.shape_cast %21 : vector<2x8x8x16xf32> to vector<128x16xf32>
    %c2_43 = arith.constant 2 : index
    %c0_44 = arith.constant 0 : index
    %c0_45 = arith.constant 0 : index
    %23 = vector.load %arg1[%c2_43, %c0_44, %c0_45] : memref<9x8x16xf32, #tpu.memory_space<vmem>>, vector<1x8x16xf32>
    %24 = vector.shape_cast %23 : vector<1x8x16xf32> to vector<8x16xf32>
    %cst_46 = arith.constant dense<0.000000e+00> : vector<8x128xf32>
    %25 = tpu.matmul %24, %22, %cst_46 {dimension_numbers = #tpu.dot_dimension_numbers<[1], [1], [0], [0], [0, 0, 1, 0], [], []>} : vector<8x16xf32>, vector<128x16xf32>, vector<8x128xf32> -> vector<8x128xf32>
    %26 = arith.addf %20, %25 : vector<8x128xf32>
    %c0_47 = arith.constant 0 : index
    %c1_48 = arith.constant 1 : index
    %c0_49 = arith.constant 0 : index
    %c0_50 = arith.constant 0 : index
    %27 = vector.load %arg4[%c0_47, %c1_48, %c0_49, %c0_50] : memref<2x10x16x16xf32, #tpu.memory_space<vmem>>, vector<2x8x8x16xf32>
    %28 = vector.shape_cast %27 : vector<2x8x8x16xf32> to vector<128x16xf32>
    %c3 = arith.constant 3 : index
    %c0_51 = arith.constant 0 : index
    %c0_52 = arith.constant 0 : index
    %29 = vector.load %arg1[%c3, %c0_51, %c0_52] : memref<9x8x16xf32, #tpu.memory_space<vmem>>, vector<1x8x16xf32>
    %30 = vector.shape_cast %29 : vector<1x8x16xf32> to vector<8x16xf32>
    %cst_53 = arith.constant dense<0.000000e+00> : vector<8x128xf32>
    %31 = tpu.matmul %30, %28, %cst_53 {dimension_numbers = #tpu.dot_dimension_numbers<[1], [1], [0], [0], [0, 0, 1, 0], [], []>} : vector<8x16xf32>, vector<128x16xf32>, vector<8x128xf32> -> vector<8x128xf32>
    %32 = arith.addf %26, %31 : vector<8x128xf32>
    %c0_54 = arith.constant 0 : index
    %c1_55 = arith.constant 1 : index
    %c1_56 = arith.constant 1 : index
    %c0_57 = arith.constant 0 : index
    %33 = vector.load %arg4[%c0_54, %c1_55, %c1_56, %c0_57] : memref<2x10x16x16xf32, #tpu.memory_space<vmem>>, vector<2x8x8x16xf32>
    %34 = vector.shape_cast %33 : vector<2x8x8x16xf32> to vector<128x16xf32>
    %c4 = arith.constant 4 : index
    %c0_58 = arith.constant 0 : index
    %c0_59 = arith.constant 0 : index
    %35 = vector.load %arg1[%c4, %c0_58, %c0_59] : memref<9x8x16xf32, #tpu.memory_space<vmem>>, vector<1x8x16xf32>
    %36 = vector.shape_cast %35 : vector<1x8x16xf32> to vector<8x16xf32>
    %cst_60 = arith.constant dense<0.000000e+00> : vector<8x128xf32>
    %37 = tpu.matmul %36, %34, %cst_60 {dimension_numbers = #tpu.dot_dimension_numbers<[1], [1], [0], [0], [0, 0, 1, 0], [], []>} : vector<8x16xf32>, vector<128x16xf32>, vector<8x128xf32> -> vector<8x128xf32>
    %38 = arith.addf %32, %37 : vector<8x128xf32>
    %c0_61 = arith.constant 0 : index
    %c1_62 = arith.constant 1 : index
    %c2_63 = arith.constant 2 : index
    %c0_64 = arith.constant 0 : index
    %39 = vector.load %arg4[%c0_61, %c1_62, %c2_63, %c0_64] : memref<2x10x16x16xf32, #tpu.memory_space<vmem>>, vector<2x8x8x16xf32>
    %40 = vector.shape_cast %39 : vector<2x8x8x16xf32> to vector<128x16xf32>
    %c5 = arith.constant 5 : index
    %c0_65 = arith.constant 0 : index
    %c0_66 = arith.constant 0 : index
    %41 = vector.load %arg1[%c5, %c0_65, %c0_66] : memref<9x8x16xf32, #tpu.memory_space<vmem>>, vector<1x8x16xf32>
    %42 = vector.shape_cast %41 : vector<1x8x16xf32> to vector<8x16xf32>
    %cst_67 = arith.constant dense<0.000000e+00> : vector<8x128xf32>
    %43 = tpu.matmul %42, %40, %cst_67 {dimension_numbers = #tpu.dot_dimension_numbers<[1], [1], [0], [0], [0, 0, 1, 0], [], []>} : vector<8x16xf32>, vector<128x16xf32>, vector<8x128xf32> -> vector<8x128xf32>
    %44 = arith.addf %38, %43 : vector<8x128xf32>
    %c0_68 = arith.constant 0 : index
    %c2_69 = arith.constant 2 : index
    %c0_70 = arith.constant 0 : index
    %c0_71 = arith.constant 0 : index
    %45 = vector.load %arg4[%c0_68, %c2_69, %c0_70, %c0_71] : memref<2x10x16x16xf32, #tpu.memory_space<vmem>>, vector<2x8x8x16xf32>
    %46 = vector.shape_cast %45 : vector<2x8x8x16xf32> to vector<128x16xf32>
    %c6 = arith.constant 6 : index
    %c0_72 = arith.constant 0 : index
    %c0_73 = arith.constant 0 : index
    %47 = vector.load %arg1[%c6, %c0_72, %c0_73] : memref<9x8x16xf32, #tpu.memory_space<vmem>>, vector<1x8x16xf32>
    %48 = vector.shape_cast %47 : vector<1x8x16xf32> to vector<8x16xf32>
    %cst_74 = arith.constant dense<0.000000e+00> : vector<8x128xf32>
    %49 = tpu.matmul %48, %46, %cst_74 {dimension_numbers = #tpu.dot_dimension_numbers<[1], [1], [0], [0], [0, 0, 1, 0], [], []>} : vector<8x16xf32>, vector<128x16xf32>, vector<8x128xf32> -> vector<8x128xf32>
    %50 = arith.addf %44, %49 : vector<8x128xf32>
    %c0_75 = arith.constant 0 : index
    %c2_76 = arith.constant 2 : index
    %c1_77 = arith.constant 1 : index
    %c0_78 = arith.constant 0 : index
    %51 = vector.load %arg4[%c0_75, %c2_76, %c1_77, %c0_78] : memref<2x10x16x16xf32, #tpu.memory_space<vmem>>, vector<2x8x8x16xf32>
    %52 = vector.shape_cast %51 : vector<2x8x8x16xf32> to vector<128x16xf32>
    %c7 = arith.constant 7 : index
    %c0_79 = arith.constant 0 : index
    %c0_80 = arith.constant 0 : index
    %53 = vector.load %arg1[%c7, %c0_79, %c0_80] : memref<9x8x16xf32, #tpu.memory_space<vmem>>, vector<1x8x16xf32>
    %54 = vector.shape_cast %53 : vector<1x8x16xf32> to vector<8x16xf32>
    %cst_81 = arith.constant dense<0.000000e+00> : vector<8x128xf32>
    %55 = tpu.matmul %54, %52, %cst_81 {dimension_numbers = #tpu.dot_dimension_numbers<[1], [1], [0], [0], [0, 0, 1, 0], [], []>} : vector<8x16xf32>, vector<128x16xf32>, vector<8x128xf32> -> vector<8x128xf32>
    %56 = arith.addf %50, %55 : vector<8x128xf32>
    %c0_82 = arith.constant 0 : index
    %c2_83 = arith.constant 2 : index
    %c2_84 = arith.constant 2 : index
    %c0_85 = arith.constant 0 : index
    %57 = vector.load %arg4[%c0_82, %c2_83, %c2_84, %c0_85] : memref<2x10x16x16xf32, #tpu.memory_space<vmem>>, vector<2x8x8x16xf32>
    %58 = vector.shape_cast %57 : vector<2x8x8x16xf32> to vector<128x16xf32>
    %c8 = arith.constant 8 : index
    %c0_86 = arith.constant 0 : index
    %c0_87 = arith.constant 0 : index
    %59 = vector.load %arg1[%c8, %c0_86, %c0_87] : memref<9x8x16xf32, #tpu.memory_space<vmem>>, vector<1x8x16xf32>
    %60 = vector.shape_cast %59 : vector<1x8x16xf32> to vector<8x16xf32>
    %cst_88 = arith.constant dense<0.000000e+00> : vector<8x128xf32>
    %61 = tpu.matmul %60, %58, %cst_88 {dimension_numbers = #tpu.dot_dimension_numbers<[1], [1], [0], [0], [0, 0, 1, 0], [], []>} : vector<8x16xf32>, vector<128x16xf32>, vector<8x128xf32> -> vector<8x128xf32>
    %62 = arith.addf %56, %61 : vector<8x128xf32>
    %c0_89 = arith.constant 0 : index
    %c0_90 = arith.constant 0 : index
    %63 = vector.load %arg3[%c0_89, %c0_90] : memref<8x128xf32, #tpu.memory_space<vmem>>, vector<8x128xf32>
    tpu.vector_store %arg3[%c0_89, %c0_90], %62 {strides = array<i32>} : memref<8x128xf32, #tpu.memory_space<vmem>>, vector<8x128xf32>,
    return
  }
  func.func @transform_0(%arg0: i32) -> (i32, i32, i32) {
    %c0_i32 = arith.constant 0 : i32
    %c0_i32_0 = arith.constant 0 : i32
    %c0_i32_1 = arith.constant 0 : i32
    %c0_i32_2 = arith.constant 0 : i32
    return %c0_i32, %c0_i32_0, %c0_i32_1 : i32, i32, i32
  }
  func.func @transform_1(%arg0: i32) -> (i32, i32, i32, i32) {
    %c0_i32 = arith.constant 0 : i32
    %c0_i32_0 = arith.constant 0 : i32
    %c0_i32_1 = arith.constant 0 : i32
    %c0_i32_2 = arith.constant 0 : i32
    return %arg0, %c0_i32, %c0_i32_0, %c0_i32_1 : i32, i32, i32, i32
  }
  func.func @transform_2(%arg0: i32) -> (i32, i32) {
    %c0_i32 = arith.constant 0 : i32
    %c0_i32_0 = arith.constant 0 : i32
    return %c0_i32, %arg0 : i32, i32
  }
}

</mosaic_0001>

<llo_original>
// kernel: tpu_custom_call.1
$region0: #{tpu_custom_call.1}
  #allocation0 [shape = 'u32[]', space=smem, size = 0x4, offset = 0x4, fixed_abs, tag = 'smem constant byte address 0x4 - core index']
  #allocation1 [shape = 'u32[144,128]{1,0:T(1,128)}', space=vmem, size = 0x12000, scoped, tag = 'internal scratch']
  #allocation2 [shape = 'f32[2,10,16,16]{3,2,1,0:T(8,128)}', space=vmem, size = 0x28000, scoped, tag = 'scratch operand']
  %s0 = inlined_call_operand.hbm [shape: f32[9,8,16], index: 0, kind: input, shape index: {}]
  %s1 = inlined_call_operand.hbm [shape: f32[2,8,8,16], index: 1, kind: input, shape index: {}]
  %s2 = inlined_call_operand.hbm [shape: f32[8,128], index: 2, kind: output, shape index: {}]
  %s3 = sld [smem:[#allocation0]]
  $region26: #{tpu_custom_call.1} parent=0
    _
  %s5 = ssub.s32 1, %s3
  %s6 = scalar_select 0, %s5, %s3
  $region1: #{tpu_custom_call.1} parent=0
    #allocation3 [shape = 'u8[36864]{0}', space=vmem, size = 0x9000, scoped, tag = 'input window, operand 0, single buffered']
    #allocation4 [shape = 's32[1]{0}', space=sflag, size = 0x4, scoped, tag = 'scoped memory for tpu_custom_call.1']
    #allocation5 [shape = 's32[1]{0}', space=sflag, size = 0x4, scoped, tag = 'scoped memory for tpu_custom_call.1']
    #allocation6 [shape = 'u8[65536]{0}', space=vmem, size = 0x10000, scoped, tag = 'input window, operand 1, single buffered']
    #allocation7 [shape = 's32[1]{0}', space=sflag, size = 0x4, scoped, tag = 'scoped memory for tpu_custom_call.1']
    #allocation8 [shape = 'u8[4096]{0}', space=vmem, size = 0x1000, scoped, tag = 'output window, operand 0, single buffered']
    %7 = vsyncpa [#allocation4], 0
    %8 = vsyncpa [#allocation7], 0
    %9 = vsyncpa [#allocation5], 0
    // Predicated region
    $region2: #{tpu_custom_call.1} parent=1 // pred_check
      _
    $region3: #{tpu_custom_call.1} parent=1 // pred_check_branch
      %11 = sbr.rel (0) target = $region5
    $region4: #{tpu_custom_call.1} parent=1 // pred_region
      %s13 = ssub.s32 1152, 1152
      %14 = vsyncadd [#allocation4], %s13
      %s15 = sshll.u32 [#allocation3], 4
      %s16 = int_to_ptr.vmem [resolvable:$true] %s15
      %21 = dma.hbm_to_vmem [thread:$0]  %s0, 1152, %s16, [#allocation4], 128, 128, 8
    $region5: #{tpu_custom_call.1} parent=1 // pred_fallthru
      _
    // Predicated region
    $region6: #{tpu_custom_call.1} parent=1 // pred_check
      _
    $region7: #{tpu_custom_call.1} parent=1 // pred_check_branch
      %23 = sbr.rel (0) target = $region9
    $region8: #{tpu_custom_call.1} parent=1 // pred_region
      %s25 = ssub.s32 2048, 2048
      %26 = vsyncadd [#allocation7], %s25
      %s27 = sshll.u32 [#allocation6], 4
      %s28 = int_to_ptr.vmem [resolvable:$true] %s27
      %33 = dma.hbm_to_vmem [thread:$0]  %s1, 2048, %s28, [#allocation7], 128, 128, 8
    $region9: #{tpu_custom_call.1} parent=1 // pred_fallthru
      _
    // Predicated region
    $region10: #{tpu_custom_call.1} parent=1 // pred_check
      _
    $region11: #{tpu_custom_call.1} parent=1 // pred_check_branch
      %35 = sbr.rel (0) target = $region13
    $region12: #{tpu_custom_call.1} parent=1 // pred_region
      %36 = dma.done [#allocation4], 1152
    $region13: #{tpu_custom_call.1} parent=1 // pred_fallthru
      _
    // Predicated region
    $region14: #{tpu_custom_call.1} parent=1 // pred_check
      _
    $region15: #{tpu_custom_call.1} parent=1 // pred_check_branch
      %38 = sbr.rel (0) target = $region17
    $region16: #{tpu_custom_call.1} parent=1 // pred_region
      %39 = dma.done [#allocation7], 2048
    $region17: #{tpu_custom_call.1} parent=1 // pred_fallthru
      _
    %vm40 = vcmask 130048
    %41 = vst.msk [vmem:[#allocation2] sm:$0xff] %vm40, 0.0
    %42 = vst.msk [vmem:[#allocation2 + $0x8] sm:$0xff] %vm40, 0.0
    %43 = vst.msk [vmem:[#allocation2 + $0xa0] sm:$0xff] %vm40, 0.0
    %44 = vst.msk [vmem:[#allocation2 + $0xa8] sm:$0xff] %vm40, 0.0
    %s45 = scalar_lea.vmem [#allocation2], 144
    %46 = vst.msk [vmem:[%s45] sm:$0xff] %vm40, 0.0
    %47 = vst.msk [vmem:[%s45 + $0x8] sm:$0xff] %vm40, 0.0
    %48 = vst.msk [vmem:[%s45 + $0xa0] sm:$0xff] %vm40, 0.0
    %49 = vst.msk [vmem:[%s45 + $0xa8] sm:$0xff] %vm40, 0.0
    %vm50 = vcmask 122880
    %51 = vst.msk [vmem:[#allocation2] sm:$0x1] %vm50, 0.0
    %52 = vst.msk [vmem:[#allocation2 + $0x10] sm:$0x1] %vm50, 0.0
    %53 = vst.msk [vmem:[#allocation2 + $0x20] sm:$0x1] %vm50, 0.0
    %54 = vst.msk [vmem:[#allocation2 + $0x30] sm:$0x1] %vm50, 0.0
    %55 = vst.msk [vmem:[#allocation2 + $0x40] sm:$0x1] %vm50, 0.0
    %56 = vst.msk [vmem:[#allocation2 + $0x50] sm:$0x1] %vm50, 0.0
    %57 = vst.msk [vmem:[#allocation2 + $0x60] sm:$0x1] %vm50, 0.0
    %58 = vst.msk [vmem:[#allocation2 + $0x70] sm:$0x1] %vm50, 0.0
    %59 = vst.msk [vmem:[#allocation2 + $0x80] sm:$0x1] %vm50, 0.0
    %60 = vst.msk [vmem:[#allocation2 + $0x90] sm:$0x1] %vm50, 0.0
    %61 = vst.msk [vmem:[#allocation2 + $0xa0] sm:$0x1] %vm50, 0.0
    %62 = vst.msk [vmem:[#allocation2 + $0xb0] sm:$0x1] %vm50, 0.0
    %63 = vst.msk [vmem:[#allocation2 + $0xc0] sm:$0x1] %vm50, 0.0
    %64 = vst.msk [vmem:[#allocation2 + $0xd0] sm:$0x1] %vm50, 0.0
    %65 = vst.msk [vmem:[#allocation2 + $0xe0] sm:$0x1] %vm50, 0.0
    %66 = vst.msk [vmem:[#allocation2 + $0xf0] sm:$0x1] %vm50, 0.0
    %67 = vst.msk [vmem:[#allocation2 + $0x100] sm:$0x1] %vm50, 0.0
    %68 = vst.msk [vmem:[#allocation2 + $0x110] sm:$0x1] %vm50, 0.0
    %69 = vst.msk [vmem:[#allocation2 + $0x120] sm:$0x1] %vm50, 0.0
    %70 = vst.msk [vmem:[#allocation2 + $0x130] sm:$0x1] %vm50, 0.0
    %71 = vst.msk [vmem:[#allocation2 + $0x9] sm:$0x1] %vm50, 0.0
    %72 = vst.msk [vmem:[#allocation2 + $0x19] sm:$0x1] %vm50, 0.0
    %73 = vst.msk [vmem:[#allocation2 + $0x29] sm:$0x1] %vm50, 0.0
    %74 = vst.msk [vmem:[#allocation2 + $0x39] sm:$0x1] %vm50, 0.0
    %75 = vst.msk [vmem:[#allocation2 + $0x49] sm:$0x1] %vm50, 0.0
    %76 = vst.msk [vmem:[#allocation2 + $0x59] sm:$0x1] %vm50, 0.0
    %77 = vst.msk [vmem:[#allocation2 + $0x69] sm:$0x1] %vm50, 0.0
    %78 = vst.msk [vmem:[#allocation2 + $0x79] sm:$0x1] %vm50, 0.0
    %79 = vst.msk [vmem:[#allocation2 + $0x89] sm:$0x1] %vm50, 0.0
    %80 = vst.msk [vmem:[#allocation2 + $0x99] sm:$0x1] %vm50, 0.0
    %81 = vst.msk [vmem:[#allocation2 + $0xa9] sm:$0x1] %vm50, 0.0
    %82 = vst.msk [vmem:[#allocation2 + $0xb9] sm:$0x1] %vm50, 0.0
    %83 = vst.msk [vmem:[#allocation2 + $0xc9] sm:$0x1] %vm50, 0.0
    %84 = vst.msk [vmem:[#allocation2 + $0xd9] sm:$0x1] %vm50, 0.0
    %85 = vst.msk [vmem:[#allocation2 + $0xe9] sm:$0x1] %vm50, 0.0
    %86 = vst.msk [vmem:[#allocation2 + $0xf9] sm:$0x1] %vm50, 0.0
    %87 = vst.msk [vmem:[#allocation2 + $0x109] sm:$0x1] %vm50, 0.0
    %88 = vst.msk [vmem:[#allocation2 + $0x119] sm:$0x1] %vm50, 0.0
    %89 = vst.msk [vmem:[#allocation2 + $0x129] sm:$0x1] %vm50, 0.0
    %90 = vst.msk [vmem:[#allocation2 + $0x139] sm:$0x1] %vm50, 0.0
    %v91 = vld [vmem:[#allocation6] sm:$0xff]
    %v92 = vld [vmem:[#allocation6 + $0x8] sm:$0xff]
    %v93 = vld [vmem:[#allocation6 + $0x10] sm:$0xff]
    %v94 = vld [vmem:[#allocation6 + $0x18] sm:$0xff]
    %v95 = vld [vmem:[#allocation6 + $0x20] sm:$0xff]
    %v96 = vld [vmem:[#allocation6 + $0x28] sm:$0xff]
    %v97 = vld [vmem:[#allocation6 + $0x30] sm:$0xff]
    %v98 = vld [vmem:[#allocation6 + $0x38] sm:$0xff]
    %v99 = vld [vmem:[#allocation6 + $0x40] sm:$0xff]
    %v100 = vld [vmem:[#allocation6 + $0x48] sm:$0xff]
    %v101 = vld [vmem:[#allocation6 + $0x50] sm:$0xff]
    %v102 = vld [vmem:[#allocation6 + $0x58] sm:$0xff]
    %v103 = vld [vmem:[#allocation6 + $0x60] sm:$0xff]
    %v104 = vld [vmem:[#allocation6 + $0x68] sm:$0xff]
    %v105 = vld [vmem:[#allocation6 + $0x70] sm:$0xff]
    %v106 = vld [vmem:[#allocation6 + $0x78] sm:$0xff]
    %s107 = scalar_lea.vmem [#allocation2], 16
    %108 = vst.msk [vmem:[%s107 + $0x1] sm:$0xff] %vm40, %v91
    %109 = vst.msk [vmem:[%s107 + $0x11] sm:$0xff] %vm40, %v92
    %110 = vst.msk [vmem:[%s107 + $0x21] sm:$0xff] %vm40, %v93
    %111 = vst.msk [vmem:[%s107 + $0x31] sm:$0xff] %vm40, %v94
    %112 = vst.msk [vmem:[%s107 + $0x41] sm:$0xff] %vm40, %v95
    %113 = vst.msk [vmem:[%s107 + $0x51] sm:$0xff] %vm40, %v96
    %114 = vst.msk [vmem:[%s107 + $0x61] sm:$0xff] %vm40, %v97
    %115 = vst.msk [vmem:[%s107 + $0x71] sm:$0xff] %vm40, %v98
    %116 = vst.msk [vmem:[%s107 + $0xa1] sm:$0xff] %vm40, %v99
    %117 = vst.msk [vmem:[%s107 + $0xb1] sm:$0xff] %vm40, %v100
    %118 = vst.msk [vmem:[%s107 + $0xc1] sm:$0xff] %vm40, %v101
    %119 = vst.msk [vmem:[%s107 + $0xd1] sm:$0xff] %vm40, %v102
    %120 = vst.msk [vmem:[%s107 + $0xe1] sm:$0xff] %vm40, %v103
    %121 = vst.msk [vmem:[%s107 + $0xf1] sm:$0xff] %vm40, %v104
    %122 = vst.msk [vmem:[%s107 + $0x101] sm:$0xff] %vm40, %v105
    %123 = vst.msk [vmem:[%s107 + $0x111] sm:$0xff] %vm40, %v106
    %v124 = vld [vmem:[#allocation2] sm:$0xff]
    %v125 = vld [vmem:[#allocation2 + $0x10] sm:$0xff]
    %v126 = vld [vmem:[#allocation2 + $0x20] sm:$0xff]
    %v127 = vld [vmem:[#allocation2 + $0x30] sm:$0xff]
    %v128 = vld [vmem:[#allocation2 + $0x40] sm:$0xff]
    %v129 = vld [vmem:[#allocation2 + $0x50] sm:$0xff]
    %v130 = vld [vmem:[#allocation2 + $0x60] sm:$0xff]
    %v131 = vld [vmem:[#allocation2 + $0x70] sm:$0xff]
    %v132 = vld [vmem:[#allocation2 + $0xa0] sm:$0xff]
    %v133 = vld [vmem:[#allocation2 + $0xb0] sm:$0xff]
    %v134 = vld [vmem:[#allocation2 + $0xc0] sm:$0xff]
    %v135 = vld [vmem:[#allocation2 + $0xd0] sm:$0xff]
    %v136 = vld [vmem:[#allocation2 + $0xe0] sm:$0xff]
    %v137 = vld [vmem:[#allocation2 + $0xf0] sm:$0xff]
    %v138 = vld [vmem:[#allocation2 + $0x100] sm:$0xff]
    %v139 = vld [vmem:[#allocation2 + $0x110] sm:$0xff]
    %v140 = vld [vmem:[#allocation3] sm:$0xff]
    %v141 = vld [vmem:[#allocation2 + $0x1] sm:$0xff]
    %v142 = vld [vmem:[#allocation2 + $0x11] sm:$0xff]
    %v143 = vld [vmem:[#allocation2 + $0x21] sm:$0xff]
    %v144 = vld [vmem:[#allocation2 + $0x31] sm:$0xff]
    %v145 = vld [vmem:[#allocation2 + $0x41] sm:$0xff]
    %v146 = vld [vmem:[#allocation2 + $0x51] sm:$0xff]
    %v147 = vld [vmem:[#allocation2 + $0x61] sm:$0xff]
    %v148 = vld [vmem:[#allocation2 + $0x71] sm:$0xff]
    %v149 = vld [vmem:[#allocation2 + $0xa1] sm:$0xff]
    %v150 = vld [vmem:[#allocation2 + $0xb1] sm:$0xff]
    %v151 = vld [vmem:[#allocation2 + $0xc1] sm:$0xff]
    %v152 = vld [vmem:[#allocation2 + $0xd1] sm:$0xff]
    %v153 = vld [vmem:[#allocation2 + $0xe1] sm:$0xff]
    %v154 = vld [vmem:[#allocation2 + $0xf1] sm:$0xff]
    %v155 = vld [vmem:[#allocation2 + $0x101] sm:$0xff]
    %v156 = vld [vmem:[#allocation2 + $0x111] sm:$0xff]
    %s157 = scalar_lea.vmem [#allocation3], 8
    %v158 = vld [vmem:[%s157] sm:$0xff]
    %v160 = vsel %vm40, %v158, 0
    %v163 = vsel %vm40, %v141, 0
    %v166 = vsel %vm40, %v142, 0
    %v169 = vsel %vm40, %v143, 0
    %v172 = vsel %vm40, %v144, 0
    %v175 = vsel %vm40, %v145, 0
    %v178 = vsel %vm40, %v146, 0
    %v181 = vsel %vm40, %v147, 0
    %v184 = vsel %vm40, %v148, 0
    %v187 = vsel %vm40, %v149, 0
    %v190 = vsel %vm40, %v150, 0
    %v193 = vsel %vm40, %v151, 0
    %v196 = vsel %vm40, %v152, 0
    %v199 = vsel %vm40, %v153, 0
    %v202 = vsel %vm40, %v154, 0
    %v205 = vsel %vm40, %v155, 0
    %v208 = vsel %vm40, %v156, 0
    %210 = vmatprep.subr.mxu0 0.0
    %211 = vmatpush1.xpose.msra.mxu0 %v208
    %212 = vmatprep.subr.mxu0 0.0
    %213 = vmatpush1.xpose.msra.mxu0 %v205
    %214 = vmatprep.subr.mxu0 0.0
    %215 = vmatpush1.xpose.msra.mxu0 %v202
    %216 = vmatprep.subr.mxu0 0.0
    %217 = vmatpush1.xpose.msra.mxu0 %v199
    %218 = vmatprep.subr.mxu0 0.0
    %219 = vmatpush1.xpose.msra.mxu0 %v196
    %220 = vmatprep.subr.mxu0 0.0
    %221 = vmatpush1.xpose.msra.mxu0 %v193
    %222 = vmatprep.subr.mxu0 0.0
    %223 = vmatpush1.xpose.msra.mxu0 %v190
    %224 = vmatprep.subr.mxu0 0.0
    %225 = vmatpush1.xpose.msra.mxu0 %v187
    %226 = vmatprep.subr.mxu0 0.0
    %227 = vmatpush1.xpose.msra.mxu0 %v184
    %228 = vmatprep.subr.mxu0 0.0
    %229 = vmatpush1.xpose.msra.mxu0 %v181
    %230 = vmatprep.subr.mxu0 0.0
    %231 = vmatpush1.xpose.msra.mxu0 %v178
    %232 = vmatprep.subr.mxu0 0.0
    %233 = vmatpush1.xpose.msra.mxu0 %v175
    %234 = vmatprep.subr.mxu0 0.0
    %235 = vmatpush1.xpose.msra.mxu0 %v172
    %236 = vmatprep.subr.mxu0 0.0
    %237 = vmatpush1.xpose.msra.mxu0 %v169
    %238 = vmatprep.subr.mxu0 0.0
    %239 = vmatpush1.xpose.msra.mxu0 %v166
    %240 = vmatprep.subr.mxu0 0.0
    %241 = vmatpush1.xpose.msra.mxu0 %v163
    %242 = vmatprep.subr.mxu0 0.0
    %243 = vmatpush2.xpose.msra.mxu0 0.0
    %244 = vmatprep.subr.mxu0 0.0
    %245 = vmatpush2.xpose.msra.mxu0 0.0
    %246 = vmatprep.subr.mxu0 0.0
    %247 = vmatpush2.xpose.msra.mxu0 0.0
    %248 = vmatprep.subr.mxu0 0.0
    %249 = vmatpush2.xpose.msra.mxu0 0.0
    %250 = vmatprep.subr.mxu0 0.0
    %251 = vmatpush2.xpose.msra.mxu0 0.0
    %252 = vmatprep.subr.mxu0 0.0
    %253 = vmatpush2.xpose.msra.mxu0 0.0
    %254 = vmatprep.subr.mxu0 0.0
    %255 = vmatpush2.xpose.msra.mxu0 0.0
    %256 = vmatprep.subr.mxu0 0.0
    %257 = vmatpush2.xpose.msra.mxu0 0.0
    %258 = vmatprep.subr.mxu0 0.0
    %259 = vmatpush2.xpose.msra.mxu0 0.0
    %260 = vmatprep.subr.mxu0 0.0
    %261 = vmatpush2.xpose.msra.mxu0 0.0
    %262 = vmatprep.subr.mxu0 0.0
    %263 = vmatpush2.xpose.msra.mxu0 0.0
    %264 = vmatprep.subr.mxu0 0.0
    %265 = vmatpush2.xpose.msra.mxu0 0.0
    %266 = vmatprep.subr.mxu0 0.0
    %267 = vmatpush2.xpose.msra.mxu0 0.0
    %268 = vmatprep.subr.mxu0 0.0
    %269 = vmatpush2.xpose.msra.mxu0 0.0
    %270 = vmatprep.subr.mxu0 0.0
    %271 = vmatpush2.xpose.msra.mxu0 0.0
    %272 = vmatprep.subr.mxu0 0.0
    %273 = vmatpush2.xpose.msra.mxu0 0.0
    %274 = vmatprep.mubr.f32.mxu0 0.0
    %275 = vmatmul.mubr.f32.gmra.mxu0 %v160
    %v276 = vpop.f32.mrf.mxu0
    %v277 = vadd.f32 0.0, %v276
    %v278 = vpop.f32.mrf.mxu0
    %279 = vdwg.mxu0
    %v281 = vsel %vm40, %v140, 0
    %v284 = vsel %vm40, %v124, 0
    %v287 = vsel %vm40, %v125, 0
    %v290 = vsel %vm40, %v126, 0
    %v293 = vsel %vm40, %v127, 0
    %v296 = vsel %vm40, %v128, 0
    %v299 = vsel %vm40, %v129, 0
    %v302 = vsel %vm40, %v130, 0
    %v305 = vsel %vm40, %v131, 0
    %v308 = vsel %vm40, %v132, 0
    %v311 = vsel %vm40, %v133, 0
    %v314 = vsel %vm40, %v134, 0
    %v317 = vsel %vm40, %v135, 0
    %v320 = vsel %vm40, %v136, 0
    %v323 = vsel %vm40, %v137, 0
    %v326 = vsel %vm40, %v138, 0
    %v329 = vsel %vm40, %v139, 0
    %331 = vmatprep.subr.mxu0 0.0
    %332 = vmatpush1.xpose.msra.mxu0 %v329
    %333 = vmatprep.subr.mxu0 0.0
    %334 = vmatpush1.xpose.msra.mxu0 %v326
    %335 = vmatprep.subr.mxu0 0.0
    %336 = vmatpush1.xpose.msra.mxu0 %v323
    %337 = vmatprep.subr.mxu0 0.0
    %338 = vmatpush1.xpose.msra.mxu0 %v320
    %339 = vmatprep.subr.mxu0 0.0
    %340 = vmatpush1.xpose.msra.mxu0 %v317
    %341 = vmatprep.subr.mxu0 0.0
    %342 = vmatpush1.xpose.msra.mxu0 %v314
    %343 = vmatprep.subr.mxu0 0.0
    %344 = vmatpush1.xpose.msra.mxu0 %v311
    %345 = vmatprep.subr.mxu0 0.0
    %346 = vmatpush1.xpose.msra.mxu0 %v308
    %347 = vmatprep.subr.mxu0 0.0
    %348 = vmatpush1.xpose.msra.mxu0 %v305
    %349 = vmatprep.subr.mxu0 0.0
    %350 = vmatpush1.xpose.msra.mxu0 %v302
    %351 = vmatprep.subr.mxu0 0.0
    %352 = vmatpush1.xpose.msra.mxu0 %v299
    %353 = vmatprep.subr.mxu0 0.0
    %354 = vmatpush1.xpose.msra.mxu0 %v296
    %355 = vmatprep.subr.mxu0 0.0
    %356 = vmatpush1.xpose.msra.mxu0 %v293
    %357 = vmatprep.subr.mxu0 0.0
    %358 = vmatpush1.xpose.msra.mxu0 %v290
    %359 = vmatprep.subr.mxu0 0.0
    %360 = vmatpush1.xpose.msra.mxu0 %v287
    %361 = vmatprep.subr.mxu0 0.0
    %362 = vmatpush1.xpose.msra.mxu0 %v284
    %363 = vmatprep.subr.mxu0 0.0
    %364 = vmatpush2.xpose.msra.mxu0 0.0
    %365 = vmatprep.subr.mxu0 0.0
    %366 = vmatpush2.xpose.msra.mxu0 0.0
    %367 = vmatprep.subr.mxu0 0.0
    %368 = vmatpush2.xpose.msra.mxu0 0.0
    %369 = vmatprep.subr.mxu0 0.0
    %370 = vmatpush2.xpose.msra.mxu0 0.0
    %371 = vmatprep.subr.mxu0 0.0
    %372 = vmatpush2.xpose.msra.mxu0 0.0
    %373 = vmatprep.subr.mxu0 0.0
    %374 = vmatpush2.xpose.msra.mxu0 0.0
    %375 = vmatprep.subr.mxu0 0.0
    %376 = vmatpush2.xpose.msra.mxu0 0.0
    %377 = vmatprep.subr.mxu0 0.0
    %378 = vmatpush2.xpose.msra.mxu0 0.0
    %379 = vmatprep.subr.mxu0 0.0
    %380 = vmatpush2.xpose.msra.mxu0 0.0
    %381 = vmatprep.subr.mxu0 0.0
    %382 = vmatpush2.xpose.msra.mxu0 0.0
    %383 = vmatprep.subr.mxu0 0.0
    %384 = vmatpush2.xpose.msra.mxu0 0.0
    %385 = vmatprep.subr.mxu0 0.0
    %386 = vmatpush2.xpose.msra.mxu0 0.0
    %387 = vmatprep.subr.mxu0 0.0
    %388 = vmatpush2.xpose.msra.mxu0 0.0
    %389 = vmatprep.subr.mxu0 0.0
    %390 = vmatpush2.xpose.msra.mxu0 0.0
    %391 = vmatprep.subr.mxu0 0.0
    %392 = vmatpush2.xpose.msra.mxu0 0.0
    %393 = vmatprep.subr.mxu0 0.0
    %394 = vmatpush2.xpose.msra.mxu0 0.0
    %395 = vmatprep.mubr.f32.mxu0 0.0
    %396 = vmatmul.mubr.f32.gmra.mxu0 %v281
    %v397 = vpop.f32.mrf.mxu0
    %v398 = vadd.f32 %v277, %v397
    %v399 = vpop.f32.mrf.mxu0
    %400 = vdwg.mxu0
    %v401 = vld [vmem:[#allocation2 + $0x2] sm:$0xff]
    %v402 = vld [vmem:[#allocation2 + $0x12] sm:$0xff]
    %v403 = vld [vmem:[#allocation2 + $0x22] sm:$0xff]
    %v404 = vld [vmem:[#allocation2 + $0x32] sm:$0xff]
    %v405 = vld [vmem:[#allocation2 + $0x42] sm:$0xff]
    %v406 = vld [vmem:[#allocation2 + $0x52] sm:$0xff]
    %v407 = vld [vmem:[#allocation2 + $0x62] sm:$0xff]
    %v408 = vld [vmem:[#allocation2 + $0x72] sm:$0xff]
    %v409 = vld [vmem:[#allocation2 + $0xa2] sm:$0xff]
    %v410 = vld [vmem:[#allocation2 + $0xb2] sm:$0xff]
    %v411 = vld [vmem:[#allocation2 + $0xc2] sm:$0xff]
    %v412 = vld [vmem:[#allocation2 + $0xd2] sm:$0xff]
    %v413 = vld [vmem:[#allocation2 + $0xe2] sm:$0xff]
    %v414 = vld [vmem:[#allocation2 + $0xf2] sm:$0xff]
    %v415 = vld [vmem:[#allocation2 + $0x102] sm:$0xff]
    %v416 = vld [vmem:[#allocation2 + $0x112] sm:$0xff]
    %s417 = scalar_lea.vmem [#allocation3], 16
    %v418 = vld [vmem:[%s417] sm:$0xff]
    %v420 = vsel %vm40, %v418, 0
    %v423 = vsel %vm40, %v401, 0
    %v426 = vsel %vm40, %v402, 0
    %v429 = vsel %vm40, %v403, 0
    %v432 = vsel %vm40, %v404, 0
    %v435 = vsel %vm40, %v405, 0
    %v438 = vsel %vm40, %v406, 0
    %v441 = vsel %vm40, %v407, 0
    %v444 = vsel %vm40, %v408, 0
    %v447 = vsel %vm40, %v409, 0
    %v450 = vsel %vm40, %v410, 0
    %v453 = vsel %vm40, %v411, 0
    %v456 = vsel %vm40, %v412, 0
    %v459 = vsel %vm40, %v413, 0
    %v462 = vsel %vm40, %v414, 0
    %v465 = vsel %vm40, %v415, 0
    %v468 = vsel %vm40, %v416, 0
    %470 = vmatprep.subr.mxu0 0.0
    %471 = vmatpush1.xpose.msra.mxu0 %v468
    %472 = vmatprep.subr.mxu0 0.0
    %473 = vmatpush1.xpose.msra.mxu0 %v465
    %474 = vmatprep.subr.mxu0 0.0
    %475 = vmatpush1.xpose.msra.mxu0 %v462
    %476 = vmatprep.subr.mxu0 0.0
    %477 = vmatpush1.xpose.msra.mxu0 %v459
    %478 = vmatprep.subr.mxu0 0.0
    %479 = vmatpush1.xpose.msra.mxu0 %v456
    %480 = vmatprep.subr.mxu0 0.0
    %481 = vmatpush1.xpose.msra.mxu0 %v453
    %482 = vmatprep.subr.mxu0 0.0
    %483 = vmatpush1.xpose.msra.mxu0 %v450
    %484 = vmatprep.subr.mxu0 0.0
    %485 = vmatpush1.xpose.msra.mxu0 %v447
    %486 = vmatprep.subr.mxu0 0.0
    %487 = vmatpush1.xpose.msra.mxu0 %v444
    %488 = vmatprep.subr.mxu0 0.0
    %489 = vmatpush1.xpose.msra.mxu0 %v441
    %490 = vmatprep.subr.mxu0 0.0
    %491 = vmatpush1.xpose.msra.mxu0 %v438
    %492 = vmatprep.subr.mxu0 0.0
    %493 = vmatpush1.xpose.msra.mxu0 %v435
    %494 = vmatprep.subr.mxu0 0.0
    %495 = vmatpush1.xpose.msra.mxu0 %v432
    %496 = vmatprep.subr.mxu0 0.0
    %497 = vmatpush1.xpose.msra.mxu0 %v429
    %498 = vmatprep.subr.mxu0 0.0
    %499 = vmatpush1.xpose.msra.mxu0 %v426
    %500 = vmatprep.subr.mxu0 0.0
    %501 = vmatpush1.xpose.msra.mxu0 %v423
    %502 = vmatprep.subr.mxu0 0.0
    %503 = vmatpush2.xpose.msra.mxu0 0.0
    %504 = vmatprep.subr.mxu0 0.0
    %505 = vmatpush2.xpose.msra.mxu0 0.0
    %506 = vmatprep.subr.mxu0 0.0
    %507 = vmatpush2.xpose.msra.mxu0 0.0
    %508 = vmatprep.subr.mxu0 0.0
    %509 = vmatpush2.xpose.msra.mxu0 0.0
    %510 = vmatprep.subr.mxu0 0.0
    %511 = vmatpush2.xpose.msra.mxu0 0.0
    %512 = vmatprep.subr.mxu0 0.0
    %513 = vmatpush2.xpose.msra.mxu0 0.0
    %514 = vmatprep.subr.mxu0 0.0
    %515 = vmatpush2.xpose.msra.mxu0 0.0
    %516 = vmatprep.subr.mxu0 0.0
    %517 = vmatpush2.xpose.msra.mxu0 0.0
    %518 = vmatprep.subr.mxu0 0.0
    %519 = vmatpush2.xpose.msra.mxu0 0.0
    %520 = vmatprep.subr.mxu0 0.0
    %521 = vmatpush2.xpose.msra.mxu0 0.0
    %522 = vmatprep.subr.mxu0 0.0
    %523 = vmatpush2.xpose.msra.mxu0 0.0
    %524 = vmatprep.subr.mxu0 0.0
    %525 = vmatpush2.xpose.msra.mxu0 0.0
    %526 = vmatprep.subr.mxu0 0.0
    %527 = vmatpush2.xpose.msra.mxu0 0.0
    %528 = vmatprep.subr.mxu0 0.0
    %529 = vmatpush2.xpose.msra.mxu0 0.0
    %530 = vmatprep.subr.mxu0 0.0
    %531 = vmatpush2.xpose.msra.mxu0 0.0
    %532 = vmatprep.subr.mxu0 0.0
    %533 = vmatpush2.xpose.msra.mxu0 0.0
    %534 = vmatprep.mubr.f32.mxu0 0.0
    %535 = vmatmul.mubr.f32.gmra.mxu0 %v420
    %v536 = vpop.f32.mrf.mxu0
    %v537 = vadd.f32 0.0, %v536
    %v538 = vpop.f32.mrf.mxu0
    %539 = vdwg.mxu0
    %v540 = vadd.f32 %v398, %v537
    %v541 = vld [vmem:[%s107] sm:$0xff]
    %v542 = vld [vmem:[%s107 + $0x10] sm:$0xff]
    %v543 = vld [vmem:[%s107 + $0x20] sm:$0xff]
    %v544 = vld [vmem:[%s107 + $0x30] sm:$0xff]
    %v545 = vld [vmem:[%s107 + $0x40] sm:$0xff]
    %v546 = vld [vmem:[%s107 + $0x50] sm:$0xff]
    %v547 = vld [vmem:[%s107 + $0x60] sm:$0xff]
    %v548 = vld [vmem:[%s107 + $0x70] sm:$0xff]
    %v549 = vld [vmem:[%s107 + $0xa0] sm:$0xff]
    %v550 = vld [vmem:[%s107 + $0xb0] sm:$0xff]
    %v551 = vld [vmem:[%s107 + $0xc0] sm:$0xff]
    %v552 = vld [vmem:[%s107 + $0xd0] sm:$0xff]
    %v553 = vld [vmem:[%s107 + $0xe0] sm:$0xff]
    %v554 = vld [vmem:[%s107 + $0xf0] sm:$0xff]
    %v555 = vld [vmem:[%s107 + $0x100] sm:$0xff]
    %v556 = vld [vmem:[%s107 + $0x110] sm:$0xff]
    %s557 = scalar_lea.vmem [#allocation3], 24
    %v558 = vld [vmem:[%s557] sm:$0xff]
    %v560 = vsel %vm40, %v558, 0
    %v563 = vsel %vm40, %v541, 0
    %v566 = vsel %vm40, %v542, 0
    %v569 = vsel %vm40, %v543, 0
    %v572 = vsel %vm40, %v544, 0
    %v575 = vsel %vm40, %v545, 0
    %v578 = vsel %vm40, %v546, 0
    %v581 = vsel %vm40, %v547, 0
    %v584 = vsel %vm40, %v548, 0
    %v587 = vsel %vm40, %v549, 0
    %v590 = vsel %vm40, %v550, 0
    %v593 = vsel %vm40, %v551, 0
    %v596 = vsel %vm40, %v552, 0
    %v599 = vsel %vm40, %v553, 0
    %v602 = vsel %vm40, %v554, 0
    %v605 = vsel %vm40, %v555, 0
    %v608 = vsel %vm40, %v556, 0
    %610 = vmatprep.subr.mxu0 0.0
    %611 = vmatpush1.xpose.msra.mxu0 %v608
    %612 = vmatprep.subr.mxu0 0.0
    %613 = vmatpush1.xpose.msra.mxu0 %v605
    %614 = vmatprep.subr.mxu0 0.0
    %615 = vmatpush1.xpose.msra.mxu0 %v602
    %616 = vmatprep.subr.mxu0 0.0
    %617 = vmatpush1.xpose.msra.mxu0 %v599
    %618 = vmatprep.subr.mxu0 0.0
    %619 = vmatpush1.xpose.msra.mxu0 %v596
    %620 = vmatprep.subr.mxu0 0.0
    %621 = vmatpush1.xpose.msra.mxu0 %v593
    %622 = vmatprep.subr.mxu0 0.0
    %623 = vmatpush1.xpose.msra.mxu0 %v590
    %624 = vmatprep.subr.mxu0 0.0
    %625 = vmatpush1.xpose.msra.mxu0 %v587
    %626 = vmatprep.subr.mxu0 0.0
    %627 = vmatpush1.xpose.msra.mxu0 %v584
    %628 = vmatprep.subr.mxu0 0.0
    %629 = vmatpush1.xpose.msra.mxu0 %v581
    %630 = vmatprep.subr.mxu0 0.0
    %631 = vmatpush1.xpose.msra.mxu0 %v578
    %632 = vmatprep.subr.mxu0 0.0
    %633 = vmatpush1.xpose.msra.mxu0 %v575
    %634 = vmatprep.subr.mxu0 0.0
    %635 = vmatpush1.xpose.msra.mxu0 %v572
    %636 = vmatprep.subr.mxu0 0.0
    %637 = vmatpush1.xpose.msra.mxu0 %v569
    %638 = vmatprep.subr.mxu0 0.0
    %639 = vmatpush1.xpose.msra.mxu0 %v566
    %640 = vmatprep.subr.mxu0 0.0
    %641 = vmatpush1.xpose.msra.mxu0 %v563
    %642 = vmatprep.subr.mxu0 0.0
    %643 = vmatpush2.xpose.msra.mxu0 0.0
    %644 = vmatprep.subr.mxu0 0.0
    %645 = vmatpush2.xpose.msra.mxu0 0.0
    %646 = vmatprep.subr.mxu0 0.0
    %647 = vmatpush2.xpose.msra.mxu0 0.0
    %648 = vmatprep.subr.mxu0 0.0
    %649 = vmatpush2.xpose.msra.mxu0 0.0
    %650 = vmatprep.subr.mxu0 0.0
    %651 = vmatpush2.xpose.msra.mxu0 0.0
    %652 = vmatprep.subr.mxu0 0.0
    %653 = vmatpush2.xpose.msra.mxu0 0.0
    %654 = vmatprep.subr.mxu0 0.0
    %655 = vmatpush2.xpose.msra.mxu0 0.0
    %656 = vmatprep.subr.mxu0 0.0
    %657 = vmatpush2.xpose.msra.mxu0 0.0
    %658 = vmatprep.subr.mxu0 0.0
    %659 = vmatpush2.xpose.msra.mxu0 0.0
    %660 = vmatprep.subr.mxu0 0.0
    %661 = vmatpush2.xpose.msra.mxu0 0.0
    %662 = vmatprep.subr.mxu0 0.0
    %663 = vmatpush2.xpose.msra.mxu0 0.0
    %664 = vmatprep.subr.mxu0 0.0
    %665 = vmatpush2.xpose.msra.mxu0 0.0
    %666 = vmatprep.subr.mxu0 0.0
    %667 = vmatpush2.xpose.msra.mxu0 0.0
    %668 = vmatprep.subr.mxu0 0.0
    %669 = vmatpush2.xpose.msra.mxu0 0.0
    %670 = vmatprep.subr.mxu0 0.0
    %671 = vmatpush2.xpose.msra.mxu0 0.0
    %672 = vmatprep.subr.mxu0 0.0
    %673 = vmatpush2.xpose.msra.mxu0 0.0
    %674 = vmatprep.mubr.f32.mxu0 0.0
    %675 = vmatmul.mubr.f32.gmra.mxu0 %v560
    %v676 = vpop.f32.mrf.mxu0
    %v677 = vadd.f32 0.0, %v676
    %v678 = vpop.f32.mrf.mxu0
    %679 = vdwg.mxu0
    %v680 = vadd.f32 %v540, %v677
    %v681 = vld [vmem:[%s107 + $0x1] sm:$0xff]
    %v682 = vld [vmem:[%s107 + $0x11] sm:$0xff]
    %v683 = vld [vmem:[%s107 + $0x21] sm:$0xff]
    %v684 = vld [vmem:[%s107 + $0x31] sm:$0xff]
    %v685 = vld [vmem:[%s107 + $0x41] sm:$0xff]
    %v686 = vld [vmem:[%s107 + $0x51] sm:$0xff]
    %v687 = vld [vmem:[%s107 + $0x61] sm:$0xff]
    %v688 = vld [vmem:[%s107 + $0x71] sm:$0xff]
    %v689 = vld [vmem:[%s107 + $0xa1] sm:$0xff]
    %v690 = vld [vmem:[%s107 + $0xb1] sm:$0xff]
    %v691 = vld [vmem:[%s107 + $0xc1] sm:$0xff]
    %v692 = vld [vmem:[%s107 + $0xd1] sm:$0xff]
    %v693 = vld [vmem:[%s107 + $0xe1] sm:$0xff]
    %v694 = vld [vmem:[%s107 + $0xf1] sm:$0xff]
    %v695 = vld [vmem:[%s107 + $0x101] sm:$0xff]
    %v696 = vld [vmem:[%s107 + $0x111] sm:$0xff]
    %s697 = scalar_lea.vmem [#allocation3], 32
    %v698 = vld [vmem:[%s697] sm:$0xff]
    %v700 = vsel %vm40, %v698, 0
    %v703 = vsel %vm40, %v681, 0
    %v706 = vsel %vm40, %v682, 0
    %v709 = vsel %vm40, %v683, 0
    %v712 = vsel %vm40, %v684, 0
    %v715 = vsel %vm40, %v685, 0
    %v718 = vsel %vm40, %v686, 0
    %v721 = vsel %vm40, %v687, 0
    %v724 = vsel %vm40, %v688, 0
    %v727 = vsel %vm40, %v689, 0
    %v730 = vsel %vm40, %v690, 0
    %v733 = vsel %vm40, %v691, 0
    %v736 = vsel %vm40, %v692, 0
    %v739 = vsel %vm40, %v693, 0
    %v742 = vsel %vm40, %v694, 0
    %v745 = vsel %vm40, %v695, 0
    %v748 = vsel %vm40, %v696, 0
    %750 = vmatprep.subr.mxu0 0.0
    %751 = vmatpush1.xpose.msra.mxu0 %v748
    %752 = vmatprep.subr.mxu0 0.0
    %753 = vmatpush1.xpose.msra.mxu0 %v745
    %754 = vmatprep.subr.mxu0 0.0
    %755 = vmatpush1.xpose.msra.mxu0 %v742
    %756 = vmatprep.subr.mxu0 0.0
    %757 = vmatpush1.xpose.msra.mxu0 %v739
    %758 = vmatprep.subr.mxu0 0.0
    %759 = vmatpush1.xpose.msra.mxu0 %v736
    %760 = vmatprep.subr.mxu0 0.0
    %761 = vmatpush1.xpose.msra.mxu0 %v733
    %762 = vmatprep.subr.mxu0 0.0
    %763 = vmatpush1.xpose.msra.mxu0 %v730
    %764 = vmatprep.subr.mxu0 0.0
    %765 = vmatpush1.xpose.msra.mxu0 %v727
    %766 = vmatprep.subr.mxu0 0.0
    %767 = vmatpush1.xpose.msra.mxu0 %v724
    %768 = vmatprep.subr.mxu0 0.0
    %769 = vmatpush1.xpose.msra.mxu0 %v721
    %770 = vmatprep.subr.mxu0 0.0
    %771 = vmatpush1.xpose.msra.mxu0 %v718
    %772 = vmatprep.subr.mxu0 0.0
    %773 = vmatpush1.xpose.msra.mxu0 %v715
    %774 = vmatprep.subr.mxu0 0.0
    %775 = vmatpush1.xpose.msra.mxu0 %v712
    %776 = vmatprep.subr.mxu0 0.0
    %777 = vmatpush1.xpose.msra.mxu0 %v709
    %778 = vmatprep.subr.mxu0 0.0
    %779 = vmatpush1.xpose.msra.mxu0 %v706
    %780 = vmatprep.subr.mxu0 0.0
    %781 = vmatpush1.xpose.msra.mxu0 %v703
    %782 = vmatprep.subr.mxu0 0.0
    %783 = vmatpush2.xpose.msra.mxu0 0.0
    %784 = vmatprep.subr.mxu0 0.0
    %785 = vmatpush2.xpose.msra.mxu0 0.0
    %786 = vmatprep.subr.mxu0 0.0
    %787 = vmatpush2.xpose.msra.mxu0 0.0
    %788 = vmatprep.subr.mxu0 0.0
    %789 = vmatpush2.xpose.msra.mxu0 0.0
    %790 = vmatprep.subr.mxu0 0.0
    %791 = vmatpush2.xpose.msra.mxu0 0.0
    %792 = vmatprep.subr.mxu0 0.0
    %793 = vmatpush2.xpose.msra.mxu0 0.0
    %794 = vmatprep.subr.mxu0 0.0
    %795 = vmatpush2.xpose.msra.mxu0 0.0
    %796 = vmatprep.subr.mxu0 0.0
    %797 = vmatpush2.xpose.msra.mxu0 0.0
    %798 = vmatprep.subr.mxu0 0.0
    %799 = vmatpush2.xpose.msra.mxu0 0.0
    %800 = vmatprep.subr.mxu0 0.0
    %801 = vmatpush2.xpose.msra.mxu0 0.0
    %802 = vmatprep.subr.mxu0 0.0
    %803 = vmatpush2.xpose.msra.mxu0 0.0
    %804 = vmatprep.subr.mxu0 0.0
    %805 = vmatpush2.xpose.msra.mxu0 0.0
    %806 = vmatprep.subr.mxu0 0.0
    %807 = vmatpush2.xpose.msra.mxu0 0.0
    %808 = vmatprep.subr.mxu0 0.0
    %809 = vmatpush2.xpose.msra.mxu0 0.0
    %810 = vmatprep.subr.mxu0 0.0
    %811 = vmatpush2.xpose.msra.mxu0 0.0
    %812 = vmatprep.subr.mxu0 0.0
    %813 = vmatpush2.xpose.msra.mxu0 0.0
    %814 = vmatprep.mubr.f32.mxu0 0.0
    %815 = vmatmul.mubr.f32.gmra.mxu0 %v700
    %v816 = vpop.f32.mrf.mxu0
    %v817 = vadd.f32 0.0, %v816
    %v818 = vpop.f32.mrf.mxu0
    %819 = vdwg.mxu0
    %v820 = vadd.f32 %v680, %v817
    %v821 = vld [vmem:[%s107 + $0x2] sm:$0xff]
    %v822 = vld [vmem:[%s107 + $0x12] sm:$0xff]
    %v823 = vld [vmem:[%s107 + $0x22] sm:$0xff]
    %v824 = vld [vmem:[%s107 + $0x32] sm:$0xff]
    %v825 = vld [vmem:[%s107 + $0x42] sm:$0xff]
    %v826 = vld [vmem:[%s107 + $0x52] sm:$0xff]
    %v827 = vld [vmem:[%s107 + $0x62] sm:$0xff]
    %v828 = vld [vmem:[%s107 + $0x72] sm:$0xff]
    %v829 = vld [vmem:[%s107 + $0xa2] sm:$0xff]
    %v830 = vld [vmem:[%s107 + $0xb2] sm:$0xff]
    %v831 = vld [vmem:[%s107 + $0xc2] sm:$0xff]
    %v832 = vld [vmem:[%s107 + $0xd2] sm:$0xff]
    %v833 = vld [vmem:[%s107 + $0xe2] sm:$0xff]
    %v834 = vld [vmem:[%s107 + $0xf2] sm:$0xff]
    %v835 = vld [vmem:[%s107 + $0x102] sm:$0xff]
    %v836 = vld [vmem:[%s107 + $0x112] sm:$0xff]
    %s837 = scalar_lea.vmem [#allocation3], 40
    %v838 = vld [vmem:[%s837] sm:$0xff]
    %v840 = vsel %vm40, %v838, 0
    %v843 = vsel %vm40, %v821, 0
    %v846 = vsel %vm40, %v822, 0
    %v849 = vsel %vm40, %v823, 0
    %v852 = vsel %vm40, %v824, 0
    %v855 = vsel %vm40, %v825, 0
    %v858 = vsel %vm40, %v826, 0
    %v861 = vsel %vm40, %v827, 0
    %v864 = vsel %vm40, %v828, 0
    %v867 = vsel %vm40, %v829, 0
    %v870 = vsel %vm40, %v830, 0
    %v873 = vsel %vm40, %v831, 0
    %v876 = vsel %vm40, %v832, 0
    %v879 = vsel %vm40, %v833, 0
    %v882 = vsel %vm40, %v834, 0
    %v885 = vsel %vm40, %v835, 0
    %v888 = vsel %vm40, %v836, 0
    %890 = vmatprep.subr.mxu0 0.0
    %891 = vmatpush1.xpose.msra.mxu0 %v888
    %892 = vmatprep.subr.mxu0 0.0
    %893 = vmatpush1.xpose.msra.mxu0 %v885
    %894 = vmatprep.subr.mxu0 0.0
    %895 = vmatpush1.xpose.msra.mxu0 %v882
    %896 = vmatprep.subr.mxu0 0.0
    %897 = vmatpush1.xpose.msra.mxu0 %v879
    %898 = vmatprep.subr.mxu0 0.0
    %899 = vmatpush1.xpose.msra.mxu0 %v876
    %900 = vmatprep.subr.mxu0 0.0
    %901 = vmatpush1.xpose.msra.mxu0 %v873
    %902 = vmatprep.subr.mxu0 0.0
    %903 = vmatpush1.xpose.msra.mxu0 %v870
    %904 = vmatprep.subr.mxu0 0.0
    %905 = vmatpush1.xpose.msra.mxu0 %v867
    %906 = vmatprep.subr.mxu0 0.0
    %907 = vmatpush1.xpose.msra.mxu0 %v864
    %908 = vmatprep.subr.mxu0 0.0
    %909 = vmatpush1.xpose.msra.mxu0 %v861
    %910 = vmatprep.subr.mxu0 0.0
    %911 = vmatpush1.xpose.msra.mxu0 %v858
    %912 = vmatprep.subr.mxu0 0.0
    %913 = vmatpush1.xpose.msra.mxu0 %v855
    %914 = vmatprep.subr.mxu0 0.0
    %915 = vmatpush1.xpose.msra.mxu0 %v852
    %916 = vmatprep.subr.mxu0 0.0
    %917 = vmatpush1.xpose.msra.mxu0 %v849
    %918 = vmatprep.subr.mxu0 0.0
    %919 = vmatpush1.xpose.msra.mxu0 %v846
    %920 = vmatprep.subr.mxu0 0.0
    %921 = vmatpush1.xpose.msra.mxu0 %v843
    %922 = vmatprep.subr.mxu0 0.0
    %923 = vmatpush2.xpose.msra.mxu0 0.0
    %924 = vmatprep.subr.mxu0 0.0
    %925 = vmatpush2.xpose.msra.mxu0 0.0
    %926 = vmatprep.subr.mxu0 0.0
    %927 = vmatpush2.xpose.msra.mxu0 0.0
    %928 = vmatprep.subr.mxu0 0.0
    %929 = vmatpush2.xpose.msra.mxu0 0.0
    %930 = vmatprep.subr.mxu0 0.0
    %931 = vmatpush2.xpose.msra.mxu0 0.0
    %932 = vmatprep.subr.mxu0 0.0
    %933 = vmatpush2.xpose.msra.mxu0 0.0
    %934 = vmatprep.subr.mxu0 0.0
    %935 = vmatpush2.xpose.msra.mxu0 0.0
    %936 = vmatprep.subr.mxu0 0.0
    %937 = vmatpush2.xpose.msra.mxu0 0.0
    %938 = vmatprep.subr.mxu0 0.0
    %939 = vmatpush2.xpose.msra.mxu0 0.0
    %940 = vmatprep.subr.mxu0 0.0
    %941 = vmatpush2.xpose.msra.mxu0 0.0
    %942 = vmatprep.subr.mxu0 0.0
    %943 = vmatpush2.xpose.msra.mxu0 0.0
    %944 = vmatprep.subr.mxu0 0.0
    %945 = vmatpush2.xpose.msra.mxu0 0.0
    %946 = vmatprep.subr.mxu0 0.0
    %947 = vmatpush2.xpose.msra.mxu0 0.0
    %948 = vmatprep.subr.mxu0 0.0
    %949 = vmatpush2.xpose.msra.mxu0 0.0
    %950 = vmatprep.subr.mxu0 0.0
    %951 = vmatpush2.xpose.msra.mxu0 0.0
    %952 = vmatprep.subr.mxu0 0.0
    %953 = vmatpush2.xpose.msra.mxu0 0.0
    %954 = vmatprep.mubr.f32.mxu0 0.0
    %955 = vmatmul.mubr.f32.gmra.mxu0 %v840
    %v956 = vpop.f32.mrf.mxu0
    %v957 = vadd.f32 0.0, %v956
    %v958 = vpop.f32.mrf.mxu0
    %959 = vdwg.mxu0
    %v960 = vadd.f32 %v820, %v957
    %s961 = scalar_lea.vmem [#allocation2], 32
    %v962 = vld [vmem:[%s961] sm:$0xff]
    %v963 = vld [vmem:[%s961 + $0x10] sm:$0xff]
    %v964 = vld [vmem:[%s961 + $0x20] sm:$0xff]
    %v965 = vld [vmem:[%s961 + $0x30] sm:$0xff]
    %v966 = vld [vmem:[%s961 + $0x40] sm:$0xff]
    %v967 = vld [vmem:[%s961 + $0x50] sm:$0xff]
    %v968 = vld [vmem:[%s961 + $0x60] sm:$0xff]
    %v969 = vld [vmem:[%s961 + $0x70] sm:$0xff]
    %v970 = vld [vmem:[%s961 + $0xa0] sm:$0xff]
    %v971 = vld [vmem:[%s961 + $0xb0] sm:$0xff]
    %v972 = vld [vmem:[%s961 + $0xc0] sm:$0xff]
    %v973 = vld [vmem:[%s961 + $0xd0] sm:$0xff]
    %v974 = vld [vmem:[%s961 + $0xe0] sm:$0xff]
    %v975 = vld [vmem:[%s961 + $0xf0] sm:$0xff]
    %v976 = vld [vmem:[%s961 + $0x100] sm:$0xff]
    %v977 = vld [vmem:[%s961 + $0x110] sm:$0xff]
    %s978 = scalar_lea.vmem [#allocation3], 48
    %v979 = vld [vmem:[%s978] sm:$0xff]
    %v981 = vsel %vm40, %v979, 0
    %v984 = vsel %vm40, %v962, 0
    %v987 = vsel %vm40, %v963, 0
    %v990 = vsel %vm40, %v964, 0
    %v993 = vsel %vm40, %v965, 0
    %v996 = vsel %vm40, %v966, 0
    %v999 = vsel %vm40, %v967, 0
    %v1002 = vsel %vm40, %v968, 0
    %v1005 = vsel %vm40, %v969, 0
    %v1008 = vsel %vm40, %v970, 0
    %v1011 = vsel %vm40, %v971, 0
    %v1014 = vsel %vm40, %v972, 0
    %v1017 = vsel %vm40, %v973, 0
    %v1020 = vsel %vm40, %v974, 0
    %v1023 = vsel %vm40, %v975, 0
    %v1026 = vsel %vm40, %v976, 0
    %v1029 = vsel %vm40, %v977, 0
    %1031 = vmatprep.subr.mxu0 0.0
    %1032 = vmatpush1.xpose.msra.mxu0 %v1029
    %1033 = vmatprep.subr.mxu0 0.0
    %1034 = vmatpush1.xpose.msra.mxu0 %v1026
    %1035 = vmatprep.subr.mxu0 0.0
    %1036 = vmatpush1.xpose.msra.mxu0 %v1023
    %1037 = vmatprep.subr.mxu0 0.0
    %1038 = vmatpush1.xpose.msra.mxu0 %v1020
    %1039 = vmatprep.subr.mxu0 0.0
    %1040 = vmatpush1.xpose.msra.mxu0 %v1017
    %1041 = vmatprep.subr.mxu0 0.0
    %1042 = vmatpush1.xpose.msra.mxu0 %v1014
    %1043 = vmatprep.subr.mxu0 0.0
    %1044 = vmatpush1.xpose.msra.mxu0 %v1011
    %1045 = vmatprep.subr.mxu0 0.0
    %1046 = vmatpush1.xpose.msra.mxu0 %v1008
    %1047 = vmatprep.subr.mxu0 0.0
    %1048 = vmatpush1.xpose.msra.mxu0 %v1005
    %1049 = vmatprep.subr.mxu0 0.0
    %1050 = vmatpush1.xpose.msra.mxu0 %v1002
    %1051 = vmatprep.subr.mxu0 0.0
    %1052 = vmatpush1.xpose.msra.mxu0 %v999
    %1053 = vmatprep.subr.mxu0 0.0
    %1054 = vmatpush1.xpose.msra.mxu0 %v996
    %1055 = vmatprep.subr.mxu0 0.0
    %1056 = vmatpush1.xpose.msra.mxu0 %v993
    %1057 = vmatprep.subr.mxu0 0.0
    %1058 = vmatpush1.xpose.msra.mxu0 %v990
    %1059 = vmatprep.subr.mxu0 0.0
    %1060 = vmatpush1.xpose.msra.mxu0 %v987
    %1061 = vmatprep.subr.mxu0 0.0
    %1062 = vmatpush1.xpose.msra.mxu0 %v984
    %1063 = vmatprep.subr.mxu0 0.0
    %1064 = vmatpush2.xpose.msra.mxu0 0.0
    %1065 = vmatprep.subr.mxu0 0.0
    %1066 = vmatpush2.xpose.msra.mxu0 0.0
    %1067 = vmatprep.subr.mxu0 0.0
    %1068 = vmatpush2.xpose.msra.mxu0 0.0
    %1069 = vmatprep.subr.mxu0 0.0
    %1070 = vmatpush2.xpose.msra.mxu0 0.0
    %1071 = vmatprep.subr.mxu0 0.0
    %1072 = vmatpush2.xpose.msra.mxu0 0.0
    %1073 = vmatprep.subr.mxu0 0.0
    %1074 = vmatpush2.xpose.msra.mxu0 0.0
    %1075 = vmatprep.subr.mxu0 0.0
    %1076 = vmatpush2.xpose.msra.mxu0 0.0
    %1077 = vmatprep.subr.mxu0 0.0
    %1078 = vmatpush2.xpose.msra.mxu0 0.0
    %1079 = vmatprep.subr.mxu0 0.0
    %1080 = vmatpush2.xpose.msra.mxu0 0.0
    %1081 = vmatprep.subr.mxu0 0.0
    %1082 = vmatpush2.xpose.msra.mxu0 0.0
    %1083 = vmatprep.subr.mxu0 0.0
    %1084 = vmatpush2.xpose.msra.mxu0 0.0
    %1085 = vmatprep.subr.mxu0 0.0
    %1086 = vmatpush2.xpose.msra.mxu0 0.0
    %1087 = vmatprep.subr.mxu0 0.0
    %1088 = vmatpush2.xpose.msra.mxu0 0.0
    %1089 = vmatprep.subr.mxu0 0.0
    %1090 = vmatpush2.xpose.msra.mxu0 0.0
    %1091 = vmatprep.subr.mxu0 0.0
    %1092 = vmatpush2.xpose.msra.mxu0 0.0
    %1093 = vmatprep.subr.mxu0 0.0
    %1094 = vmatpush2.xpose.msra.mxu0 0.0
    %1095 = vmatprep.mubr.f32.mxu0 0.0
    %1096 = vmatmul.mubr.f32.gmra.mxu0 %v981
    %v1097 = vpop.f32.mrf.mxu0
    %v1098 = vadd.f32 0.0, %v1097
    %v1099 = vpop.f32.mrf.mxu0
    %1100 = vdwg.mxu0
    %v1101 = vadd.f32 %v960, %v1098
    %v1102 = vld [vmem:[%s961 + $0x1] sm:$0xff]
    %v1103 = vld [vmem:[%s961 + $0x11] sm:$0xff]
    %v1104 = vld [vmem:[%s961 + $0x21] sm:$0xff]
    %v1105 = vld [vmem:[%s961 + $0x31] sm:$0xff]
    %v1106 = vld [vmem:[%s961 + $0x41] sm:$0xff]
    %v1107 = vld [vmem:[%s961 + $0x51] sm:$0xff]
    %v1108 = vld [vmem:[%s961 + $0x61] sm:$0xff]
    %v1109 = vld [vmem:[%s961 + $0x71] sm:$0xff]
    %v1110 = vld [vmem:[%s961 + $0xa1] sm:$0xff]
    %v1111 = vld [vmem:[%s961 + $0xb1] sm:$0xff]
    %v1112 = vld [vmem:[%s961 + $0xc1] sm:$0xff]
    %v1113 = vld [vmem:[%s961 + $0xd1] sm:$0xff]
    %v1114 = vld [vmem:[%s961 + $0xe1] sm:$0xff]
    %v1115 = vld [vmem:[%s961 + $0xf1] sm:$0xff]
    %v1116 = vld [vmem:[%s961 + $0x101] sm:$0xff]
    %v1117 = vld [vmem:[%s961 + $0x111] sm:$0xff]
    %s1118 = scalar_lea.vmem [#allocation3], 56
    %v1119 = vld [vmem:[%s1118] sm:$0xff]
    %v1121 = vsel %vm40, %v1119, 0
    %v1124 = vsel %vm40, %v1102, 0
    %v1127 = vsel %vm40, %v1103, 0
    %v1130 = vsel %vm40, %v1104, 0
    %v1133 = vsel %vm40, %v1105, 0
    %v1136 = vsel %vm40, %v1106, 0
    %v1139 = vsel %vm40, %v1107, 0
    %v1142 = vsel %vm40, %v1108, 0
    %v1145 = vsel %vm40, %v1109, 0
    %v1148 = vsel %vm40, %v1110, 0
    %v1151 = vsel %vm40, %v1111, 0
    %v1154 = vsel %vm40, %v1112, 0
    %v1157 = vsel %vm40, %v1113, 0
    %v1160 = vsel %vm40, %v1114, 0
    %v1163 = vsel %vm40, %v1115, 0
    %v1166 = vsel %vm40, %v1116, 0
    %v1169 = vsel %vm40, %v1117, 0
    %1171 = vmatprep.subr.mxu0 0.0
    %1172 = vmatpush1.xpose.msra.mxu0 %v1169
    %1173 = vmatprep.subr.mxu0 0.0
    %1174 = vmatpush1.xpose.msra.mxu0 %v1166
    %1175 = vmatprep.subr.mxu0 0.0
    %1176 = vmatpush1.xpose.msra.mxu0 %v1163
    %1177 = vmatprep.subr.mxu0 0.0
    %1178 = vmatpush1.xpose.msra.mxu0 %v1160
    %1179 = vmatprep.subr.mxu0 0.0
    %1180 = vmatpush1.xpose.msra.mxu0 %v1157
    %1181 = vmatprep.subr.mxu0 0.0
    %1182 = vmatpush1.xpose.msra.mxu0 %v1154
    %1183 = vmatprep.subr.mxu0 0.0
    %1184 = vmatpush1.xpose.msra.mxu0 %v1151
    %1185 = vmatprep.subr.mxu0 0.0
    %1186 = vmatpush1.xpose.msra.mxu0 %v1148
    %1187 = vmatprep.subr.mxu0 0.0
    %1188 = vmatpush1.xpose.msra.mxu0 %v1145
    %1189 = vmatprep.subr.mxu0 0.0
    %1190 = vmatpush1.xpose.msra.mxu0 %v1142
    %1191 = vmatprep.subr.mxu0 0.0
    %1192 = vmatpush1.xpose.msra.mxu0 %v1139
    %1193 = vmatprep.subr.mxu0 0.0
    %1194 = vmatpush1.xpose.msra.mxu0 %v1136
    %1195 = vmatprep.subr.mxu0 0.0
    %1196 = vmatpush1.xpose.msra.mxu0 %v1133
    %1197 = vmatprep.subr.mxu0 0.0
    %1198 = vmatpush1.xpose.msra.mxu0 %v1130
    %1199 = vmatprep.subr.mxu0 0.0
    %1200 = vmatpush1.xpose.msra.mxu0 %v1127
    %1201 = vmatprep.subr.mxu0 0.0
    %1202 = vmatpush1.xpose.msra.mxu0 %v1124
    %1203 = vmatprep.subr.mxu0 0.0
    %1204 = vmatpush2.xpose.msra.mxu0 0.0
    %1205 = vmatprep.subr.mxu0 0.0
    %1206 = vmatpush2.xpose.msra.mxu0 0.0
    %1207 = vmatprep.subr.mxu0 0.0
    %1208 = vmatpush2.xpose.msra.mxu0 0.0
    %1209 = vmatprep.subr.mxu0 0.0
    %1210 = vmatpush2.xpose.msra.mxu0 0.0
    %1211 = vmatprep.subr.mxu0 0.0
    %1212 = vmatpush2.xpose.msra.mxu0 0.0
    %1213 = vmatprep.subr.mxu0 0.0
    %1214 = vmatpush2.xpose.msra.mxu0 0.0
    %1215 = vmatprep.subr.mxu0 0.0
    %1216 = vmatpush2.xpose.msra.mxu0 0.0
    %1217 = vmatprep.subr.mxu0 0.0
    %1218 = vmatpush2.xpose.msra.mxu0 0.0
    %1219 = vmatprep.subr.mxu0 0.0
    %1220 = vmatpush2.xpose.msra.mxu0 0.0
    %1221 = vmatprep.subr.mxu0 0.0
    %1222 = vmatpush2.xpose.msra.mxu0 0.0
    %1223 = vmatprep.subr.mxu0 0.0
    %1224 = vmatpush2.xpose.msra.mxu0 0.0
    %1225 = vmatprep.subr.mxu0 0.0
    %1226 = vmatpush2.xpose.msra.mxu0 0.0
    %1227 = vmatprep.subr.mxu0 0.0
    %1228 = vmatpush2.xpose.msra.mxu0 0.0
    %1229 = vmatprep.subr.mxu0 0.0
    %1230 = vmatpush2.xpose.msra.mxu0 0.0
    %1231 = vmatprep.subr.mxu0 0.0
    %1232 = vmatpush2.xpose.msra.mxu0 0.0
    %1233 = vmatprep.subr.mxu0 0.0
    %1234 = vmatpush2.xpose.msra.mxu0 0.0
    %1235 = vmatprep.mubr.f32.mxu0 0.0
    %1236 = vmatmul.mubr.f32.gmra.mxu0 %v1121
    %v1237 = vpop.f32.mrf.mxu0
    %v1238 = vadd.f32 0.0, %v1237
    %v1239 = vpop.f32.mrf.mxu0
    %1240 = vdwg.mxu0
    %v1241 = vadd.f32 %v1101, %v1238
    %v1242 = vld [vmem:[%s961 + $0x2] sm:$0xff]
    %v1243 = vld [vmem:[%s961 + $0x12] sm:$0xff]
    %v1244 = vld [vmem:[%s961 + $0x22] sm:$0xff]
    %v1245 = vld [vmem:[%s961 + $0x32] sm:$0xff]
    %v1246 = vld [vmem:[%s961 + $0x42] sm:$0xff]
    %v1247 = vld [vmem:[%s961 + $0x52] sm:$0xff]
    %v1248 = vld [vmem:[%s961 + $0x62] sm:$0xff]
    %v1249 = vld [vmem:[%s961 + $0x72] sm:$0xff]
    %v1250 = vld [vmem:[%s961 + $0xa2] sm:$0xff]
    %v1251 = vld [vmem:[%s961 + $0xb2] sm:$0xff]
    %v1252 = vld [vmem:[%s961 + $0xc2] sm:$0xff]
    %v1253 = vld [vmem:[%s961 + $0xd2] sm:$0xff]
    %v1254 = vld [vmem:[%s961 + $0xe2] sm:$0xff]
    %v1255 = vld [vmem:[%s961 + $0xf2] sm:$0xff]
    %v1256 = vld [vmem:[%s961 + $0x102] sm:$0xff]
    %v1257 = vld [vmem:[%s961 + $0x112] sm:$0xff]
    %s1258 = scalar_lea.vmem [#allocation3], 64
    %v1259 = vld [vmem:[%s1258] sm:$0xff]
    %v1261 = vsel %vm40, %v1259, 0
    %v1264 = vsel %vm40, %v1242, 0
    %v1267 = vsel %vm40, %v1243, 0
    %v1270 = vsel %vm40, %v1244, 0
    %v1273 = vsel %vm40, %v1245, 0
    %v1276 = vsel %vm40, %v1246, 0
    %v1279 = vsel %vm40, %v1247, 0
    %v1282 = vsel %vm40, %v1248, 0
    %v1285 = vsel %vm40, %v1249, 0
    %v1288 = vsel %vm40, %v1250, 0
    %v1291 = vsel %vm40, %v1251, 0
    %v1294 = vsel %vm40, %v1252, 0
    %v1297 = vsel %vm40, %v1253, 0
    %v1300 = vsel %vm40, %v1254, 0
    %v1303 = vsel %vm40, %v1255, 0
    %v1306 = vsel %vm40, %v1256, 0
    %v1309 = vsel %vm40, %v1257, 0
    %1311 = vmatprep.subr.mxu0 0.0
    %1312 = vmatpush1.xpose.msra.mxu0 %v1309
    %1313 = vmatprep.subr.mxu0 0.0
    %1314 = vmatpush1.xpose.msra.mxu0 %v1306
    %1315 = vmatprep.subr.mxu0 0.0
    %1316 = vmatpush1.xpose.msra.mxu0 %v1303
    %1317 = vmatprep.subr.mxu0 0.0
    %1318 = vmatpush1.xpose.msra.mxu0 %v1300
    %1319 = vmatprep.subr.mxu0 0.0
    %1320 = vmatpush1.xpose.msra.mxu0 %v1297
    %1321 = vmatprep.subr.mxu0 0.0
    %1322 = vmatpush1.xpose.msra.mxu0 %v1294
    %1323 = vmatprep.subr.mxu0 0.0
    %1324 = vmatpush1.xpose.msra.mxu0 %v1291
    %1325 = vmatprep.subr.mxu0 0.0
    %1326 = vmatpush1.xpose.msra.mxu0 %v1288
    %1327 = vmatprep.subr.mxu0 0.0
    %1328 = vmatpush1.xpose.msra.mxu0 %v1285
    %1329 = vmatprep.subr.mxu0 0.0
    %1330 = vmatpush1.xpose.msra.mxu0 %v1282
    %1331 = vmatprep.subr.mxu0 0.0
    %1332 = vmatpush1.xpose.msra.mxu0 %v1279
    %1333 = vmatprep.subr.mxu0 0.0
    %1334 = vmatpush1.xpose.msra.mxu0 %v1276
    %1335 = vmatprep.subr.mxu0 0.0
    %1336 = vmatpush1.xpose.msra.mxu0 %v1273
    %1337 = vmatprep.subr.mxu0 0.0
    %1338 = vmatpush1.xpose.msra.mxu0 %v1270
    %1339 = vmatprep.subr.mxu0 0.0
    %1340 = vmatpush1.xpose.msra.mxu0 %v1267
    %1341 = vmatprep.subr.mxu0 0.0
    %1342 = vmatpush1.xpose.msra.mxu0 %v1264
    %1343 = vmatprep.subr.mxu0 0.0
    %1344 = vmatpush2.xpose.msra.mxu0 0.0
    %1345 = vmatprep.subr.mxu0 0.0
    %1346 = vmatpush2.xpose.msra.mxu0 0.0
    %1347 = vmatprep.subr.mxu0 0.0
    %1348 = vmatpush2.xpose.msra.mxu0 0.0
    %1349 = vmatprep.subr.mxu0 0.0
    %1350 = vmatpush2.xpose.msra.mxu0 0.0
    %1351 = vmatprep.subr.mxu0 0.0
    %1352 = vmatpush2.xpose.msra.mxu0 0.0
    %1353 = vmatprep.subr.mxu0 0.0
    %1354 = vmatpush2.xpose.msra.mxu0 0.0
    %1355 = vmatprep.subr.mxu0 0.0
    %1356 = vmatpush2.xpose.msra.mxu0 0.0
    %1357 = vmatprep.subr.mxu0 0.0
    %1358 = vmatpush2.xpose.msra.mxu0 0.0
    %1359 = vmatprep.subr.mxu0 0.0
    %1360 = vmatpush2.xpose.msra.mxu0 0.0
    %1361 = vmatprep.subr.mxu0 0.0
    %1362 = vmatpush2.xpose.msra.mxu0 0.0
    %1363 = vmatprep.subr.mxu0 0.0
    %1364 = vmatpush2.xpose.msra.mxu0 0.0
    %1365 = vmatprep.subr.mxu0 0.0
    %1366 = vmatpush2.xpose.msra.mxu0 0.0
    %1367 = vmatprep.subr.mxu0 0.0
    %1368 = vmatpush2.xpose.msra.mxu0 0.0
    %1369 = vmatprep.subr.mxu0 0.0
    %1370 = vmatpush2.xpose.msra.mxu0 0.0
    %1371 = vmatprep.subr.mxu0 0.0
    %1372 = vmatpush2.xpose.msra.mxu0 0.0
    %1373 = vmatprep.subr.mxu0 0.0
    %1374 = vmatpush2.xpose.msra.mxu0 0.0
    %1375 = vmatprep.mubr.f32.mxu0 0.0
    %1376 = vmatmul.mubr.f32.gmra.mxu0 %v1261
    %v1377 = vpop.f32.mrf.mxu0
    %v1378 = vadd.f32 0.0, %v1377
    %v1379 = vpop.f32.mrf.mxu0
    %1380 = vdwg.mxu0
    %v1381 = vadd.f32 %v1241, %v1378
    %1382 = vst [vmem:[#allocation8] sm:$0xff] %v1381
    // Predicated region
    $region18: #{tpu_custom_call.1} parent=1 // pred_check
      _
    $region19: #{tpu_custom_call.1} parent=1 // pred_check_branch
      %1384 = sbr.rel (0) target = $region21
    $region20: #{tpu_custom_call.1} parent=1 // pred_region
      %s1386 = ssub.s32 128, 128
      %1387 = vsyncadd [#allocation5], %s1386
      %s1389 = sshll.u32 [#allocation8], 4
      %s1390 = int_to_ptr.vmem [resolvable:$true] %s1389
      %1392 = dma.vmem_to_hbm [thread:$0]  %s1390, 128, %s2, [#allocation5]
    $region21: #{tpu_custom_call.1} parent=1 // pred_fallthru
      _
    // Predicated region
    $region22: #{tpu_custom_call.1} parent=1 // pred_check
      _
    $region23: #{tpu_custom_call.1} parent=1 // pred_check_branch
      %1394 = sbr.rel (0) target = $region25
    $region24: #{tpu_custom_call.1} parent=1 // pred_region
      %1395 = dma.done [#allocation5], 128
    $region25: #{tpu_custom_call.1} parent=1 // pred_fallthru
      _
    %1396 = vsyncpa [#allocation4], 1
    %1397 = vsyncpa [#allocation7], 1
    %1398 = vsyncpa [#allocation5], 1

</llo_original>
